<compile_context>
chip_gen: v7x
topology: tpu7x:2x2x1
jax: 0.10.0
libtpu: 0.0.40
codegen_flags: <defaults>
</compile_context>

<pallas_src>
import functools

import jax
import jax.numpy as jnp
from jax.experimental import pallas as pl
from jax.experimental.pallas import tpu as pltpu


# ---------------------------------------------------------------------------
# Fused kernel: embeddings -> num_layers x (GINEConv + residual + BN [+ReLU])
#               -> global_add_pool -> prediction head
# ---------------------------------------------------------------------------

def _ginet_fused_kernel(
    # graph / feature inputs (constant block index over the layer grid)
    xf_ref, eraw_ref, row_ref, col_ref, batch_ref, norm_ref, dinv_ref,
    # embedding weights
    xw_ref, xb_ref, ew_ref, eb_ref,
    # per-layer stacked weights (block-indexed by grid step == layer)
    wlin_ref, blin_ref, root_ref, w1_ref, b1_ref, w2_ref, b2_ref,
    bns_ref, bnh_ref,
    # prediction head
    p1w_ref, p1b_ref, p2w_ref, p2b_ref, p3w_ref, p3b_ref,
    # output
    out_ref,
    # scratch (persists across grid steps)
    h_scr, e_scr,
):
    layer = pl.program_id(0)
    n_layers = pl.num_programs(0)
    E = row_ref.shape[0]
    N = h_scr.shape[0]
    G = out_ref.shape[0]

    # ---- step 0: node / edge embeddings (fused into the first layer) ----
    @pl.when(layer == 0)
    def _():
        h_scr[...] = (
            jnp.dot(xf_ref[...], xw_ref[...],
                    preferred_element_type=jnp.float32) + xb_ref[...])
        e_scr[...] = (
            jnp.dot(eraw_ref[...], ew_ref[...],
                    preferred_element_type=jnp.float32) + eb_ref[...])

    h_in = h_scr[...]                                               # (N, D) f32

    # ---- GINEConv ----
    # x = self.linear(x)
    x = (jnp.dot(h_in.astype(jnp.bfloat16), wlin_ref[0],
                 preferred_element_type=jnp.float32) + blin_ref[0])  # (N, D)

    # gather x_j = x[row]: one-hot mask built in VMEM from int indices
    gmat = (jax.lax.broadcasted_iota(jnp.int32, (E, N), 1)
            == row_ref[...]).astype(jnp.float32).astype(jnp.bfloat16)   # (E, N)
    x_j = jnp.dot(gmat, x.astype(jnp.bfloat16),
                  preferred_element_type=jnp.float32)                   # (E, D)

    # message: norm * relu(x_j + edge_attr)
    msg = norm_ref[...] * jnp.maximum(x_j + e_scr[...], 0.0)            # (E, D)

    # scatter-add onto target nodes: aggr[n] = sum_{e: col[e]==n} msg[e]
    smat = (jax.lax.broadcasted_iota(jnp.int32, (N, E), 0)
            == col_ref[...]).astype(jnp.float32).astype(jnp.bfloat16)   # (N, E)
    aggr = jnp.dot(smat, msg.astype(jnp.bfloat16),
                   preferred_element_type=jnp.float32)                  # (N, D)

    # update: mlp(aggr) = Linear(D,2D) -> ReLU -> Linear(2D,D)
    hid = jnp.maximum(
        jnp.dot(aggr.astype(jnp.bfloat16), w1_ref[0],
                preferred_element_type=jnp.float32) + b1_ref[0], 0.0)
    upd = (jnp.dot(hid.astype(jnp.bfloat16), w2_ref[0],
                   preferred_element_type=jnp.float32) + b2_ref[0])

    # + relu(x + root_emb) / deg
    conv = upd + jnp.maximum(x + root_ref[0], 0.0) * dinv_ref[...]

    # residual + folded BatchNorm1d (inference)
    h = (h_in + conv) * bns_ref[0] + bnh_ref[0]
    h_scr[...] = h

    # ReLU on all but the last layer
    @pl.when(layer < n_layers - 1)
    def _():
        h_scr[...] = jnp.maximum(h_scr[...], 0.0)
    # TODO(synk): F.dropout omitted — inference semantics (training=False).

    # ---- last step: global_add_pool + prediction head ----
    @pl.when(layer == n_layers - 1)
    def _():
        pmat = (jax.lax.broadcasted_iota(jnp.int32, (G, N), 0)
                == batch_ref[...]).astype(jnp.float32).astype(jnp.bfloat16)  # (G, N)
        pooled = jnp.dot(pmat, h_scr[...].astype(jnp.bfloat16),
                         preferred_element_type=jnp.float32)                  # (G, D)
        o = jnp.maximum(
            jnp.dot(pooled.astype(jnp.bfloat16), p1w_ref[...],
                    preferred_element_type=jnp.float32) + p1b_ref[...], 0.0)
        o = jnp.maximum(
            jnp.dot(o.astype(jnp.bfloat16), p2w_ref[...],
                    preferred_element_type=jnp.float32) + p2b_ref[...], 0.0)
        out_ref[...] = (
            jnp.dot(o.astype(jnp.bfloat16), p3w_ref[...],
                    preferred_element_type=jnp.float32) + p3b_ref[...])


# ---------------------------------------------------------------------------
# Parameter init (deterministic, synthetic). MXU weights stored bf16.
# ---------------------------------------------------------------------------

def _dense(key, fan_in, fan_out):
    kw, kb = jax.random.split(key)
    w = jax.random.normal(kw, (fan_in, fan_out), jnp.float32) / jnp.sqrt(fan_in)
    b = jax.random.normal(kb, (1, fan_out), jnp.float32) * 0.01
    return w, b


def init_ginet_params(key, emb_dim=128, num_layers=4, bn_eps=1e-5):
    keys = jax.random.split(key, 2 + 4 * num_layers + 3)
    it = iter(keys)
    p = {}

    w, b = _dense(next(it), 40, emb_dim)
    p["x_emb_w"], p["x_emb_b"] = w.astype(jnp.bfloat16), b
    w, b = _dense(next(it), 10, emb_dim)
    p["e_emb_w"], p["e_emb_b"] = w.astype(jnp.bfloat16), b

    wl, bl, rt, w1l, b1l, w2l, b2l, bns, bnh = ([] for _ in range(9))
    for _ in range(num_layers):
        w, b = _dense(next(it), emb_dim, emb_dim)
        wl.append(w.astype(jnp.bfloat16)); bl.append(b)
        rt.append(jax.random.normal(next(it), (1, emb_dim), jnp.float32) * 0.1)
        w, b = _dense(next(it), emb_dim, 2 * emb_dim)
        w1l.append(w.astype(jnp.bfloat16)); b1l.append(b)
        w, b = _dense(next(it), 2 * emb_dim, emb_dim)
        w2l.append(w.astype(jnp.bfloat16)); b2l.append(b)
        # BatchNorm1d defaults: gamma=1, beta=0, mean=0, var=1 (folded)
        gamma = jnp.ones((1, emb_dim), jnp.float32)
        beta = jnp.zeros((1, emb_dim), jnp.float32)
        mean = jnp.zeros((1, emb_dim), jnp.float32)
        var = jnp.ones((1, emb_dim), jnp.float32)
        scale = gamma * jax.lax.rsqrt(var + bn_eps)
        bns.append(scale)
        bnh.append(beta - mean * scale)

    p["wlin"], p["blin"], p["root"] = jnp.stack(wl), jnp.stack(bl), jnp.stack(rt)
    p["w1"], p["b1"] = jnp.stack(w1l), jnp.stack(b1l)
    p["w2"], p["b2"] = jnp.stack(w2l), jnp.stack(b2l)
    p["bn_scale"], p["bn_shift"] = jnp.stack(bns), jnp.stack(bnh)

    half = emb_dim // 2
    w, b = _dense(next(it), emb_dim, half)
    p["p1_w"], p["p1_b"] = w.astype(jnp.bfloat16), b
    w, b = _dense(next(it), half, half)
    p["p2_w"], p["p2_b"] = w.astype(jnp.bfloat16), b
    w, b = _dense(next(it), half, 1)
    p["p3_w"], p["p3_b"] = w.astype(jnp.bfloat16), b
    return p


# ---------------------------------------------------------------------------
# GINet forward (one pallas_call)
# ---------------------------------------------------------------------------

def ginet_forward(params, x, edge_index, edge_attr, batch, num_graphs,
                  num_layers=4):
    N = x.shape[0]
    E = edge_index.shape[1]
    D = params["wlin"].shape[-1]
    H = D // 2
    G = num_graphs
    row, col = edge_index[0], edge_index[1]

    # --- tiny O(N+E) glue: degree / norm / index vectors ---
    deg = jnp.zeros((N,), jnp.float32).at[row].add(1.0) + 1.0   # deg >= 1
    dinv_sqrt = jax.lax.rsqrt(deg)
    norm = (dinv_sqrt[row] * dinv_sqrt[col]).reshape(E, 1)
    dinv = (1.0 / deg).reshape(N, 1)
    row2d = row.astype(jnp.int32).reshape(E, 1)
    col2d = col.astype(jnp.int32).reshape(1, E)
    batch2d = batch.astype(jnp.int32).reshape(1, N)

    xf = x.astype(jnp.bfloat16)
    eraw = edge_attr.astype(jnp.bfloat16)

    inputs = (
        xf, eraw, row2d, col2d, batch2d, norm, dinv,
        params["x_emb_w"], params["x_emb_b"], params["e_emb_w"], params["e_emb_b"],
        params["wlin"], params["blin"], params["root"],
        params["w1"], params["b1"], params["w2"], params["b2"],
        params["bn_scale"], params["bn_shift"],
        params["p1_w"], params["p1_b"], params["p2_w"], params["p2_b"],
        params["p3_w"], params["p3_b"],
    )

    def const_spec(a):         # loaded once, resident across the layer grid
        return pl.BlockSpec(a.shape, lambda l: (0, 0))

    def per_layer_spec(a):     # one (1, ...) slab per grid step (layer)
        return pl.BlockSpec((1,) + a.shape[1:], lambda l: (l, 0, 0))

    in_specs = [
        const_spec(xf), const_spec(eraw), const_spec(row2d), const_spec(col2d),
        const_spec(batch2d), const_spec(norm), const_spec(dinv),
        const_spec(params["x_emb_w"]), const_spec(params["x_emb_b"]),
        const_spec(params["e_emb_w"]), const_spec(params["e_emb_b"]),
        per_layer_spec(params["wlin"]), per_layer_spec(params["blin"]),
        per_layer_spec(params["root"]),
        per_layer_spec(params["w1"]), per_layer_spec(params["b1"]),
        per_layer_spec(params["w2"]), per_layer_spec(params["b2"]),
        per_layer_spec(params["bn_scale"]), per_layer_spec(params["bn_shift"]),
        const_spec(params["p1_w"]), const_spec(params["p1_b"]),
        const_spec(params["p2_w"]), const_spec(params["p2_b"]),
        const_spec(params["p3_w"]), const_spec(params["p3_b"]),
    ]

    # advisory cost estimate for XLA scheduling of surrounding glue
    flops_layer = 2 * (N * D * D + E * N * D + N * E * D + 2 * N * D * 2 * D)
    flops = (num_layers * flops_layer
             + 2 * (N * 40 * D + E * 10 * D)
             + 2 * (G * N * D + G * D * H + G * H * H + G * H))
    bytes_accessed = sum(int(a.size) * a.dtype.itemsize for a in inputs) + G * 4

    return pl.pallas_call(
        _ginet_fused_kernel,
        out_shape=jax.ShapeDtypeStruct((G, 1), jnp.float32),
        grid_spec=pltpu.PrefetchScalarGridSpec(
            num_scalar_prefetch=0,
            grid=(num_layers,),
            in_specs=in_specs,
            out_specs=pl.BlockSpec((G, 1), lambda l: (0, 0)),
            scratch_shapes=[
                pltpu.VMEM((N, D), jnp.float32),   # node state, carried across layers
                pltpu.VMEM((E, D), jnp.float32),   # edge embedding, computed once
            ]),
        compiler_params=pltpu.CompilerParams(
            dimension_semantics=("arbitrary",),
            vmem_limit_bytes=32 * 1024 * 1024),
        cost_estimate=pl.CostEstimate(
            flops=int(flops), transcendentals=0,
            bytes_accessed=int(bytes_accessed)),
    )(*inputs)


# ---------------------------------------------------------------------------
# Main
# ---------------------------------------------------------------------------

if __name__ == "__main__":
    key = jax.random.PRNGKey(0)
    k_param, k_x, k_e, k_row, k_col = jax.random.split(key, 5)

    emb_dim = 128       # small-shape stand-in for the default 512
    num_layers = 4
    N, E, NUM_GRAPHS = 16, 32, 2

    params = init_ginet_params(k_param, emb_dim=emb_dim, num_layers=num_layers)

    x = jax.random.normal(k_x, (N, 40), jnp.float32)           # node features
    edge_attr = jax.random.normal(k_e, (E, 10), jnp.float32)   # edge features
    row = jax.random.randint(k_row, (E,), 0, N, jnp.int32)
    col = jax.random.randint(k_col, (E,), 0, N, jnp.int32)
    edge_index = jnp.stack([row, col], axis=0)                 # (2, E)
    batch = jnp.concatenate([jnp.zeros((N // 2,), jnp.int32),
                             jnp.ones((N - N // 2,), jnp.int32)])

    out = ginet_forward(params, x, edge_index, edge_attr, batch,
                        num_graphs=NUM_GRAPHS, num_layers=num_layers)
    out = jax.block_until_ready(out)
    assert out.shape == (NUM_GRAPHS, 1)
    print("KERNEL_OK")
</pallas_src>

<mosaic_0001>
module attributes {stable_mosaic.version = 11 : i64} {
  func.func @_ginet_fused_kernel(%arg0: i32, %arg1: memref<16x40xbf16, #tpu.memory_space<vmem>>, %arg2: memref<32x10xbf16, #tpu.memory_space<vmem>>, %arg3: memref<32x1xi32, #tpu.memory_space<vmem>>, %arg4: memref<1x32xi32, #tpu.memory_space<vmem>>, %arg5: memref<1x16xi32, #tpu.memory_space<vmem>>, %arg6: memref<32x1xf32, #tpu.memory_space<vmem>>, %arg7: memref<16x1xf32, #tpu.memory_space<vmem>>, %arg8: memref<40x128xbf16, #tpu.memory_space<vmem>>, %arg9: memref<1x128xf32, #tpu.memory_space<vmem>>, %arg10: memref<10x128xbf16, #tpu.memory_space<vmem>>, %arg11: memref<1x128xf32, #tpu.memory_space<vmem>>, %arg12: memref<1x128x128xbf16, #tpu.memory_space<vmem>>, %arg13: memref<1x1x128xf32, #tpu.memory_space<vmem>>, %arg14: memref<1x1x128xf32, #tpu.memory_space<vmem>>, %arg15: memref<1x128x256xbf16, #tpu.memory_space<vmem>>, %arg16: memref<1x1x256xf32, #tpu.memory_space<vmem>>, %arg17: memref<1x256x128xbf16, #tpu.memory_space<vmem>>, %arg18: memref<1x1x128xf32, #tpu.memory_space<vmem>>, %arg19: memref<1x1x128xf32, #tpu.memory_space<vmem>>, %arg20: memref<1x1x128xf32, #tpu.memory_space<vmem>>, %arg21: memref<128x64xbf16, #tpu.memory_space<vmem>>, %arg22: memref<1x64xf32, #tpu.memory_space<vmem>>, %arg23: memref<64x64xbf16, #tpu.memory_space<vmem>>, %arg24: memref<1x64xf32, #tpu.memory_space<vmem>>, %arg25: memref<64x1xbf16, #tpu.memory_space<vmem>>, %arg26: memref<1x1xf32, #tpu.memory_space<vmem>>, %arg27: memref<2x1xf32, #tpu.memory_space<vmem>>, %arg28: memref<16x128xf32, #tpu.memory_space<vmem>>, %arg29: memref<32x128xf32, #tpu.memory_space<vmem>>) attributes {dimension_semantics = [#tpu.dimension_semantics<arbitrary>], iteration_bounds = array<i64: 4>, scalar_prefetch = 0 : i64, scratch_operands = 2 : i64, tpu.core_type = #tpu.core_type<tc>, window_params = [{pipeline_mode = #tpu.pipeline_mode<synchronous>, transform_indices = @transform_0, window_bounds = array<i64: 16, 40>}, {pipeline_mode = #tpu.pipeline_mode<synchronous>, transform_indices = @transform_1, window_bounds = array<i64: 32, 10>}, {pipeline_mode = #tpu.pipeline_mode<synchronous>, transform_indices = @transform_2, window_bounds = array<i64: 32, 1>}, {pipeline_mode = #tpu.pipeline_mode<synchronous>, transform_indices = @transform_3, window_bounds = array<i64: 1, 32>}, {pipeline_mode = #tpu.pipeline_mode<synchronous>, transform_indices = @transform_4, window_bounds = array<i64: 1, 16>}, {pipeline_mode = #tpu.pipeline_mode<synchronous>, transform_indices = @transform_5, window_bounds = array<i64: 32, 1>}, {pipeline_mode = #tpu.pipeline_mode<synchronous>, transform_indices = @transform_6, window_bounds = array<i64: 16, 1>}, {pipeline_mode = #tpu.pipeline_mode<synchronous>, transform_indices = @transform_7, window_bounds = array<i64: 40, 128>}, {pipeline_mode = #tpu.pipeline_mode<synchronous>, transform_indices = @transform_8, window_bounds = array<i64: 1, 128>}, {pipeline_mode = #tpu.pipeline_mode<synchronous>, transform_indices = @transform_9, window_bounds = array<i64: 10, 128>}, {pipeline_mode = #tpu.pipeline_mode<synchronous>, transform_indices = @transform_10, window_bounds = array<i64: 1, 128>}, {transform_indices = @transform_11, window_bounds = array<i64: 1, 128, 128>}, {transform_indices = @transform_12, window_bounds = array<i64: 1, 1, 128>}, {transform_indices = @transform_13, window_bounds = array<i64: 1, 1, 128>}, {transform_indices = @transform_14, window_bounds = array<i64: 1, 128, 256>}, {transform_indices = @transform_15, window_bounds = array<i64: 1, 1, 256>}, {transform_indices = @transform_16, window_bounds = array<i64: 1, 256, 128>}, {transform_indices = @transform_17, window_bounds = array<i64: 1, 1, 128>}, {transform_indices = @transform_18, window_bounds = array<i64: 1, 1, 128>}, {transform_indices = @transform_19, window_bounds = array<i64: 1, 1, 128>}, {pipeline_mode = #tpu.pipeline_mode<synchronous>, transform_indices = @transform_20, window_bounds = array<i64: 128, 64>}, {pipeline_mode = #tpu.pipeline_mode<synchronous>, transform_indices = @transform_21, window_bounds = array<i64: 1, 64>}, {pipeline_mode = #tpu.pipeline_mode<synchronous>, transform_indices = @transform_22, window_bounds = array<i64: 64, 64>}, {pipeline_mode = #tpu.pipeline_mode<synchronous>, transform_indices = @transform_23, window_bounds = array<i64: 1, 64>}, {pipeline_mode = #tpu.pipeline_mode<synchronous>, transform_indices = @transform_24, window_bounds = array<i64: 64, 1>}, {pipeline_mode = #tpu.pipeline_mode<synchronous>, transform_indices = @transform_25, window_bounds = array<i64: 1, 1>}, {pipeline_mode = #tpu.pipeline_mode<synchronous>, transform_indices = @transform_26, window_bounds = array<i64: 2, 1>}]} {
    %c0_i32 = arith.constant 0 : i32
    %0 = arith.cmpi eq, %arg0, %c0_i32 : i32
    %1 = arith.extui %0 : i1 to i32
    %c0_i32_0 = arith.constant 0 : i32
    %2 = arith.cmpi ne, %1, %c0_i32_0 : i32
    scf.if %2 {
      %c0_51 = arith.constant 0 : index
      %c0_52 = arith.constant 0 : index
      %81 = vector.load %arg1[%c0_51, %c0_52] : memref<16x40xbf16, #tpu.memory_space<vmem>>, vector<16x40xbf16>
      %c0_53 = arith.constant 0 : index
      %c0_54 = arith.constant 0 : index
      %82 = vector.load %arg8[%c0_53, %c0_54] : memref<40x128xbf16, #tpu.memory_space<vmem>>, vector<40x128xbf16>
      %cst_55 = arith.constant dense<0.000000e+00> : vector<16x128xf32>
      %83 = tpu.matmul %81, %82, %cst_55 {dimension_numbers = #tpu.dot_dimension_numbers<[1], [0], [0], [1], [0, 0, 1, 1], [], []>} : vector<16x40xbf16>, vector<40x128xbf16>, vector<16x128xf32> -> vector<16x128xf32>
      %c0_56 = arith.constant 0 : index
      %c0_57 = arith.constant 0 : index
      %84 = vector.load %arg9[%c0_56, %c0_57] : memref<1x128xf32, #tpu.memory_space<vmem>>, vector<1x128xf32>
      %85 = vector.broadcast %84 : vector<1x128xf32> to vector<16x128xf32>
      %86 = arith.addf %83, %85 : vector<16x128xf32>
      %c0_58 = arith.constant 0 : index
      %c0_59 = arith.constant 0 : index
      %87 = vector.load %arg28[%c0_58, %c0_59] : memref<16x128xf32, #tpu.memory_space<vmem>>, vector<16x128xf32>
      tpu.vector_store %arg28[%c0_58, %c0_59], %86 {strides = array<i32>} : memref<16x128xf32, #tpu.memory_space<vmem>>, vector<16x128xf32>,
      %c0_60 = arith.constant 0 : index
      %c0_61 = arith.constant 0 : index
      %88 = vector.load %arg2[%c0_60, %c0_61] : memref<32x10xbf16, #tpu.memory_space<vmem>>, vector<32x10xbf16>
      %c0_62 = arith.constant 0 : index
      %c0_63 = arith.constant 0 : index
      %89 = vector.load %arg10[%c0_62, %c0_63] : memref<10x128xbf16, #tpu.memory_space<vmem>>, vector<10x128xbf16>
      %cst_64 = arith.constant dense<0.000000e+00> : vector<32x128xf32>
      %90 = tpu.matmul %88, %89, %cst_64 {dimension_numbers = #tpu.dot_dimension_numbers<[1], [0], [0], [1], [0, 0, 1, 1], [], []>} : vector<32x10xbf16>, vector<10x128xbf16>, vector<32x128xf32> -> vector<32x128xf32>
      %c0_65 = arith.constant 0 : index
      %c0_66 = arith.constant 0 : index
      %91 = vector.load %arg11[%c0_65, %c0_66] : memref<1x128xf32, #tpu.memory_space<vmem>>, vector<1x128xf32>
      %92 = vector.broadcast %91 : vector<1x128xf32> to vector<32x128xf32>
      %93 = arith.addf %90, %92 : vector<32x128xf32>
      %c0_67 = arith.constant 0 : index
      %c0_68 = arith.constant 0 : index
      %94 = vector.load %arg29[%c0_67, %c0_68] : memref<32x128xf32, #tpu.memory_space<vmem>>, vector<32x128xf32>
      tpu.vector_store %arg29[%c0_67, %c0_68], %93 {strides = array<i32>} : memref<32x128xf32, #tpu.memory_space<vmem>>, vector<32x128xf32>,
    } else {
    }
    %c0 = arith.constant 0 : index
    %c0_1 = arith.constant 0 : index
    %3 = vector.load %arg28[%c0, %c0_1] : memref<16x128xf32, #tpu.memory_space<vmem>>, vector<16x128xf32>
    %4 = arith.truncf %3 : vector<16x128xf32> to vector<16x128xbf16>
    %c0_2 = arith.constant 0 : index
    %c0_3 = arith.constant 0 : index
    %c0_4 = arith.constant 0 : index
    %5 = vector.load %arg12[%c0_2, %c0_3, %c0_4] : memref<1x128x128xbf16, #tpu.memory_space<vmem>>, vector<1x128x128xbf16>
    %6 = vector.shape_cast %5 : vector<1x128x128xbf16> to vector<128x128xbf16>
    %cst = arith.constant dense<0.000000e+00> : vector<16x128xf32>
    %7 = tpu.matmul %4, %6, %cst {dimension_numbers = #tpu.dot_dimension_numbers<[1], [0], [0], [1], [0, 0, 1, 1], [], []>} : vector<16x128xbf16>, vector<128x128xbf16>, vector<16x128xf32> -> vector<16x128xf32>
    %c0_5 = arith.constant 0 : index
    %c0_6 = arith.constant 0 : index
    %c0_7 = arith.constant 0 : index
    %8 = vector.load %arg13[%c0_5, %c0_6, %c0_7] : memref<1x1x128xf32, #tpu.memory_space<vmem>>, vector<1x1x128xf32>
    %9 = vector.shape_cast %8 : vector<1x1x128xf32> to vector<1x128xf32>
    %10 = vector.broadcast %9 : vector<1x128xf32> to vector<16x128xf32>
    %11 = arith.addf %7, %10 : vector<16x128xf32>
    %12 = tpu.iota {dimensions = array<i32: 1>} : vector<32x16xi32>
    %c0_8 = arith.constant 0 : index
    %c0_9 = arith.constant 0 : index
    %13 = vector.load %arg3[%c0_8, %c0_9] : memref<32x1xi32, #tpu.memory_space<vmem>>, vector<32x1xi32>
    %14 = vector.broadcast %13 : vector<32x1xi32> to vector<32x16xi32>
    %15 = arith.cmpi eq, %12, %14 : vector<32x16xi32>
    %16 = arith.extui %15 : vector<32x16xi1> to vector<32x16xi32>
    %17 = arith.sitofp %16 : vector<32x16xi32> to vector<32x16xf32>
    %18 = arith.truncf %17 : vector<32x16xf32> to vector<32x16xbf16>
    %19 = arith.truncf %11 : vector<16x128xf32> to vector<16x128xbf16>
    %cst_10 = arith.constant dense<0.000000e+00> : vector<32x128xf32>
    %20 = tpu.matmul %18, %19, %cst_10 {dimension_numbers = #tpu.dot_dimension_numbers<[1], [0], [0], [1], [0, 0, 1, 1], [], []>} : vector<32x16xbf16>, vector<16x128xbf16>, vector<32x128xf32> -> vector<32x128xf32>
    %c0_11 = arith.constant 0 : index
    %c0_12 = arith.constant 0 : index
    %21 = vector.load %arg6[%c0_11, %c0_12] : memref<32x1xf32, #tpu.memory_space<vmem>>, vector<32x1xf32>
    %c0_13 = arith.constant 0 : index
    %c0_14 = arith.constant 0 : index
    %22 = vector.load %arg29[%c0_13, %c0_14] : memref<32x128xf32, #tpu.memory_space<vmem>>, vector<32x128xf32>
    %23 = arith.addf %20, %22 : vector<32x128xf32>
    %cst_15 = arith.constant 0.000000e+00 : f32
    %24 = vector.broadcast %cst_15 : f32 to vector<32x128xf32>
    %25 = arith.maximumf %23, %24 : vector<32x128xf32>
    %26 = vector.broadcast %21 : vector<32x1xf32> to vector<32x128xf32>
    %27 = arith.mulf %26, %25 : vector<32x128xf32>
    %28 = tpu.iota {dimensions = array<i32: 0>} : vector<16x32xi32>
    %c0_16 = arith.constant 0 : index
    %c0_17 = arith.constant 0 : index
    %29 = vector.load %arg4[%c0_16, %c0_17] : memref<1x32xi32, #tpu.memory_space<vmem>>, vector<1x32xi32>
    %30 = vector.broadcast %29 : vector<1x32xi32> to vector<16x32xi32>
    %31 = arith.cmpi eq, %28, %30 : vector<16x32xi32>
    %32 = arith.extui %31 : vector<16x32xi1> to vector<16x32xi32>
    %33 = arith.sitofp %32 : vector<16x32xi32> to vector<16x32xf32>
    %34 = arith.truncf %33 : vector<16x32xf32> to vector<16x32xbf16>
    %35 = arith.truncf %27 : vector<32x128xf32> to vector<32x128xbf16>
    %cst_18 = arith.constant dense<0.000000e+00> : vector<16x128xf32>
    %36 = tpu.matmul %34, %35, %cst_18 {dimension_numbers = #tpu.dot_dimension_numbers<[1], [0], [0], [1], [0, 0, 1, 1], [], []>} : vector<16x32xbf16>, vector<32x128xbf16>, vector<16x128xf32> -> vector<16x128xf32>
    %37 = arith.truncf %36 : vector<16x128xf32> to vector<16x128xbf16>
    %c0_19 = arith.constant 0 : index
    %c0_20 = arith.constant 0 : index
    %c0_21 = arith.constant 0 : index
    %38 = vector.load %arg15[%c0_19, %c0_20, %c0_21] : memref<1x128x256xbf16, #tpu.memory_space<vmem>>, vector<1x128x256xbf16>
    %39 = vector.shape_cast %38 : vector<1x128x256xbf16> to vector<128x256xbf16>
    %cst_22 = arith.constant dense<0.000000e+00> : vector<16x256xf32>
    %40 = tpu.matmul %37, %39, %cst_22 {dimension_numbers = #tpu.dot_dimension_numbers<[1], [0], [0], [1], [0, 0, 1, 1], [], []>} : vector<16x128xbf16>, vector<128x256xbf16>, vector<16x256xf32> -> vector<16x256xf32>
    %c0_23 = arith.constant 0 : index
    %c0_24 = arith.constant 0 : index
    %c0_25 = arith.constant 0 : index
    %41 = vector.load %arg16[%c0_23, %c0_24, %c0_25] : memref<1x1x256xf32, #tpu.memory_space<vmem>>, vector<1x1x256xf32>
    %42 = vector.shape_cast %41 : vector<1x1x256xf32> to vector<1x256xf32>
    %43 = vector.broadcast %42 : vector<1x256xf32> to vector<16x256xf32>
    %44 = arith.addf %40, %43 : vector<16x256xf32>
    %cst_26 = arith.constant 0.000000e+00 : f32
    %45 = vector.broadcast %cst_26 : f32 to vector<16x256xf32>
    %46 = arith.maximumf %44, %45 : vector<16x256xf32>
    %47 = arith.truncf %46 : vector<16x256xf32> to vector<16x256xbf16>
    %c0_27 = arith.constant 0 : index
    %c0_28 = arith.constant 0 : index
    %c0_29 = arith.constant 0 : index
    %48 = vector.load %arg17[%c0_27, %c0_28, %c0_29] : memref<1x256x128xbf16, #tpu.memory_space<vmem>>, vector<1x256x128xbf16>
    %49 = vector.shape_cast %48 : vector<1x256x128xbf16> to vector<256x128xbf16>
    %cst_30 = arith.constant dense<0.000000e+00> : vector<16x128xf32>
    %50 = tpu.matmul %47, %49, %cst_30 {dimension_numbers = #tpu.dot_dimension_numbers<[1], [0], [0], [1], [0, 0, 1, 1], [], []>} : vector<16x256xbf16>, vector<256x128xbf16>, vector<16x128xf32> -> vector<16x128xf32>
    %c0_31 = arith.constant 0 : index
    %c0_32 = arith.constant 0 : index
    %c0_33 = arith.constant 0 : index
    %51 = vector.load %arg18[%c0_31, %c0_32, %c0_33] : memref<1x1x128xf32, #tpu.memory_space<vmem>>, vector<1x1x128xf32>
    %52 = vector.shape_cast %51 : vector<1x1x128xf32> to vector<1x128xf32>
    %53 = vector.broadcast %52 : vector<1x128xf32> to vector<16x128xf32>
    %54 = arith.addf %50, %53 : vector<16x128xf32>
    %c0_34 = arith.constant 0 : index
    %c0_35 = arith.constant 0 : index
    %c0_36 = arith.constant 0 : index
    %55 = vector.load %arg14[%c0_34, %c0_35, %c0_36] : memref<1x1x128xf32, #tpu.memory_space<vmem>>, vector<1x1x128xf32>
    %56 = vector.shape_cast %55 : vector<1x1x128xf32> to vector<1x128xf32>
    %57 = vector.broadcast %56 : vector<1x128xf32> to vector<16x128xf32>
    %58 = arith.addf %11, %57 : vector<16x128xf32>
    %cst_37 = arith.constant 0.000000e+00 : f32
    %59 = vector.broadcast %cst_37 : f32 to vector<16x128xf32>
    %60 = arith.maximumf %58, %59 : vector<16x128xf32>
    %c0_38 = arith.constant 0 : index
    %c0_39 = arith.constant 0 : index
    %61 = vector.load %arg7[%c0_38, %c0_39] : memref<16x1xf32, #tpu.memory_space<vmem>>, vector<16x1xf32>
    %62 = vector.broadcast %61 : vector<16x1xf32> to vector<16x128xf32>
    %63 = arith.mulf %60, %62 : vector<16x128xf32>
    %64 = arith.addf %54, %63 : vector<16x128xf32>
    %65 = arith.addf %3, %64 : vector<16x128xf32>
    %c0_40 = arith.constant 0 : index
    %c0_41 = arith.constant 0 : index
    %c0_42 = arith.constant 0 : index
    %66 = vector.load %arg19[%c0_40, %c0_41, %c0_42] : memref<1x1x128xf32, #tpu.memory_space<vmem>>, vector<1x1x128xf32>
    %67 = vector.shape_cast %66 : vector<1x1x128xf32> to vector<1x128xf32>
    %68 = vector.broadcast %67 : vector<1x128xf32> to vector<16x128xf32>
    %69 = arith.mulf %65, %68 : vector<16x128xf32>
    %c0_43 = arith.constant 0 : index
    %c0_44 = arith.constant 0 : index
    %c0_45 = arith.constant 0 : index
    %70 = vector.load %arg20[%c0_43, %c0_44, %c0_45] : memref<1x1x128xf32, #tpu.memory_space<vmem>>, vector<1x1x128xf32>
    %71 = vector.shape_cast %70 : vector<1x1x128xf32> to vector<1x128xf32>
    %72 = vector.broadcast %71 : vector<1x128xf32> to vector<16x128xf32>
    %73 = arith.addf %69, %72 : vector<16x128xf32>
    %c0_46 = arith.constant 0 : index
    %c0_47 = arith.constant 0 : index
    %74 = vector.load %arg28[%c0_46, %c0_47] : memref<16x128xf32, #tpu.memory_space<vmem>>, vector<16x128xf32>
    tpu.vector_store %arg28[%c0_46, %c0_47], %73 {strides = array<i32>} : memref<16x128xf32, #tpu.memory_space<vmem>>, vector<16x128xf32>,
    %c3_i32 = arith.constant 3 : i32
    %75 = arith.cmpi slt, %arg0, %c3_i32 : i32
    %76 = arith.extui %75 : i1 to i32
    %c0_i32_48 = arith.constant 0 : i32
    %77 = arith.cmpi ne, %76, %c0_i32_48 : i32
    scf.if %77 {
      %c0_51 = arith.constant 0 : index
      %c0_52 = arith.constant 0 : index
      %81 = vector.load %arg28[%c0_51, %c0_52] : memref<16x128xf32, #tpu.memory_space<vmem>>, vector<16x128xf32>
      %cst_53 = arith.constant 0.000000e+00 : f32
      %82 = vector.broadcast %cst_53 : f32 to vector<16x128xf32>
      %83 = arith.maximumf %81, %82 : vector<16x128xf32>
      %c0_54 = arith.constant 0 : index
      %c0_55 = arith.constant 0 : index
      %84 = vector.load %arg28[%c0_54, %c0_55] : memref<16x128xf32, #tpu.memory_space<vmem>>, vector<16x128xf32>
      tpu.vector_store %arg28[%c0_54, %c0_55], %83 {strides = array<i32>} : memref<16x128xf32, #tpu.memory_space<vmem>>, vector<16x128xf32>,
    } else {
    }
    %c3_i32_49 = arith.constant 3 : i32
    %78 = arith.cmpi eq, %arg0, %c3_i32_49 : i32
    %79 = arith.extui %78 : i1 to i32
    %c0_i32_50 = arith.constant 0 : i32
    %80 = arith.cmpi ne, %79, %c0_i32_50 : i32
    scf.if %80 {
      %81 = tpu.iota {dimensions = array<i32: 0>} : vector<2x16xi32>
      %c0_51 = arith.constant 0 : index
      %c0_52 = arith.constant 0 : index
      %82 = vector.load %arg5[%c0_51, %c0_52] : memref<1x16xi32, #tpu.memory_space<vmem>>, vector<1x16xi32>
      %83 = vector.broadcast %82 : vector<1x16xi32> to vector<2x16xi32>
      %84 = arith.cmpi eq, %81, %83 : vector<2x16xi32>
      %85 = arith.extui %84 : vector<2x16xi1> to vector<2x16xi32>
      %86 = arith.sitofp %85 : vector<2x16xi32> to vector<2x16xf32>
      %87 = arith.truncf %86 : vector<2x16xf32> to vector<2x16xbf16>
      %c0_53 = arith.constant 0 : index
      %c0_54 = arith.constant 0 : index
      %88 = vector.load %arg28[%c0_53, %c0_54] : memref<16x128xf32, #tpu.memory_space<vmem>>, vector<16x128xf32>
      %89 = arith.truncf %88 : vector<16x128xf32> to vector<16x128xbf16>
      %cst_55 = arith.constant dense<0.000000e+00> : vector<2x128xf32>
      %90 = tpu.matmul %87, %89, %cst_55 {dimension_numbers = #tpu.dot_dimension_numbers<[1], [0], [0], [1], [0, 0, 1, 1], [], []>} : vector<2x16xbf16>, vector<16x128xbf16>, vector<2x128xf32> -> vector<2x128xf32>
      %91 = arith.truncf %90 : vector<2x128xf32> to vector<2x128xbf16>
      %c0_56 = arith.constant 0 : index
      %c0_57 = arith.constant 0 : index
      %92 = vector.load %arg21[%c0_56, %c0_57] : memref<128x64xbf16, #tpu.memory_space<vmem>>, vector<128x64xbf16>
      %cst_58 = arith.constant dense<0.000000e+00> : vector<2x64xf32>
      %93 = tpu.matmul %91, %92, %cst_58 {dimension_numbers = #tpu.dot_dimension_numbers<[1], [0], [0], [1], [0, 0, 1, 1], [], []>} : vector<2x128xbf16>, vector<128x64xbf16>, vector<2x64xf32> -> vector<2x64xf32>
      %c0_59 = arith.constant 0 : index
      %c0_60 = arith.constant 0 : index
      %94 = vector.load %arg22[%c0_59, %c0_60] : memref<1x64xf32, #tpu.memory_space<vmem>>, vector<1x64xf32>
      %95 = vector.broadcast %94 : vector<1x64xf32> to vector<2x64xf32>
      %96 = arith.addf %93, %95 : vector<2x64xf32>
      %cst_61 = arith.constant 0.000000e+00 : f32
      %97 = vector.broadcast %cst_61 : f32 to vector<2x64xf32>
      %98 = arith.maximumf %96, %97 : vector<2x64xf32>
      %99 = arith.truncf %98 : vector<2x64xf32> to vector<2x64xbf16>
      %c0_62 = arith.constant 0 : index
      %c0_63 = arith.constant 0 : index
      %100 = vector.load %arg23[%c0_62, %c0_63] : memref<64x64xbf16, #tpu.memory_space<vmem>>, vector<64x64xbf16>
      %cst_64 = arith.constant dense<0.000000e+00> : vector<2x64xf32>
      %101 = tpu.matmul %99, %100, %cst_64 {dimension_numbers = #tpu.dot_dimension_numbers<[1], [0], [0], [1], [0, 0, 1, 1], [], []>} : vector<2x64xbf16>, vector<64x64xbf16>, vector<2x64xf32> -> vector<2x64xf32>
      %c0_65 = arith.constant 0 : index
      %c0_66 = arith.constant 0 : index
      %102 = vector.load %arg24[%c0_65, %c0_66] : memref<1x64xf32, #tpu.memory_space<vmem>>, vector<1x64xf32>
      %103 = vector.broadcast %102 : vector<1x64xf32> to vector<2x64xf32>
      %104 = arith.addf %101, %103 : vector<2x64xf32>
      %cst_67 = arith.constant 0.000000e+00 : f32
      %105 = vector.broadcast %cst_67 : f32 to vector<2x64xf32>
      %106 = arith.maximumf %104, %105 : vector<2x64xf32>
      %107 = arith.truncf %106 : vector<2x64xf32> to vector<2x64xbf16>
      %c0_68 = arith.constant 0 : index
      %c0_69 = arith.constant 0 : index
      %108 = vector.load %arg25[%c0_68, %c0_69] : memref<64x1xbf16, #tpu.memory_space<vmem>>, vector<64x1xbf16>
      %cst_70 = arith.constant dense<0.000000e+00> : vector<2x1xf32>
      %109 = tpu.matmul %107, %108, %cst_70 {dimension_numbers = #tpu.dot_dimension_numbers<[1], [0], [0], [1], [0, 0, 1, 1], [], []>} : vector<2x64xbf16>, vector<64x1xbf16>, vector<2x1xf32> -> vector<2x1xf32>
      %c0_71 = arith.constant 0 : index
      %c0_72 = arith.constant 0 : index
      %110 = vector.load %arg26[%c0_71, %c0_72] : memref<1x1xf32, #tpu.memory_space<vmem>>, vector<1x1xf32>
      %111 = vector.broadcast %110 : vector<1x1xf32> to vector<2x1xf32>
      %112 = arith.addf %109, %111 : vector<2x1xf32>
      %c0_73 = arith.constant 0 : index
      %c0_74 = arith.constant 0 : index
      %113 = vector.load %arg27[%c0_73, %c0_74] : memref<2x1xf32, #tpu.memory_space<vmem>>, vector<2x1xf32>
      tpu.vector_store %arg27[%c0_73, %c0_74], %112 {strides = array<i32>} : memref<2x1xf32, #tpu.memory_space<vmem>>, vector<2x1xf32>,
    } else {
    }
    return
  }
  func.func @transform_0(%arg0: i32) -> (i32, i32) {
    %c0_i32 = arith.constant 0 : i32
    %c0_i32_0 = arith.constant 0 : i32
    %c0_i32_1 = arith.constant 0 : i32
    return %c0_i32, %c0_i32_0 : i32, i32
  }
  func.func @transform_1(%arg0: i32) -> (i32, i32) {
    %c0_i32 = arith.constant 0 : i32
    %c0_i32_0 = arith.constant 0 : i32
    %c0_i32_1 = arith.constant 0 : i32
    return %c0_i32, %c0_i32_0 : i32, i32
  }
  func.func @transform_2(%arg0: i32) -> (i32, i32) {
    %c0_i32 = arith.constant 0 : i32
    %c0_i32_0 = arith.constant 0 : i32
    %c0_i32_1 = arith.constant 0 : i32
    return %c0_i32, %c0_i32_0 : i32, i32
  }
  func.func @transform_3(%arg0: i32) -> (i32, i32) {
    %c0_i32 = arith.constant 0 : i32
    %c0_i32_0 = arith.constant 0 : i32
    %c0_i32_1 = arith.constant 0 : i32
    return %c0_i32, %c0_i32_0 : i32, i32
  }
  func.func @transform_4(%arg0: i32) -> (i32, i32) {
    %c0_i32 = arith.constant 0 : i32
    %c0_i32_0 = arith.constant 0 : i32
    %c0_i32_1 = arith.constant 0 : i32
    return %c0_i32, %c0_i32_0 : i32, i32
  }
  func.func @transform_5(%arg0: i32) -> (i32, i32) {
    %c0_i32 = arith.constant 0 : i32
    %c0_i32_0 = arith.constant 0 : i32
    %c0_i32_1 = arith.constant 0 : i32
    return %c0_i32, %c0_i32_0 : i32, i32
  }
  func.func @transform_6(%arg0: i32) -> (i32, i32) {
    %c0_i32 = arith.constant 0 : i32
    %c0_i32_0 = arith.constant 0 : i32
    %c0_i32_1 = arith.constant 0 : i32
    return %c0_i32, %c0_i32_0 : i32, i32
  }
  func.func @transform_7(%arg0: i32) -> (i32, i32) {
    %c0_i32 = arith.constant 0 : i32
    %c0_i32_0 = arith.constant 0 : i32
    %c0_i32_1 = arith.constant 0 : i32
    return %c0_i32, %c0_i32_0 : i32, i32
  }
  func.func @transform_8(%arg0: i32) -> (i32, i32) {
    %c0_i32 = arith.constant 0 : i32
    %c0_i32_0 = arith.constant 0 : i32
    %c0_i32_1 = arith.constant 0 : i32
    return %c0_i32, %c0_i32_0 : i32, i32
  }
  func.func @transform_9(%arg0: i32) -> (i32, i32) {
    %c0_i32 = arith.constant 0 : i32
    %c0_i32_0 = arith.constant 0 : i32
    %c0_i32_1 = arith.constant 0 : i32
    return %c0_i32, %c0_i32_0 : i32, i32
  }
  func.func @transform_10(%arg0: i32) -> (i32, i32) {
    %c0_i32 = arith.constant 0 : i32
    %c0_i32_0 = arith.constant 0 : i32
    %c0_i32_1 = arith.constant 0 : i32
    return %c0_i32, %c0_i32_0 : i32, i32
  }
  func.func @transform_11(%arg0: i32) -> (i32, i32, i32) {
    %c0_i32 = arith.constant 0 : i32
    %c0_i32_0 = arith.constant 0 : i32
    %c0_i32_1 = arith.constant 0 : i32
    return %arg0, %c0_i32, %c0_i32_0 : i32, i32, i32
  }
  func.func @transform_12(%arg0: i32) -> (i32, i32, i32) {
    %c0_i32 = arith.constant 0 : i32
    %c0_i32_0 = arith.constant 0 : i32
    %c0_i32_1 = arith.constant 0 : i32
    return %arg0, %c0_i32, %c0_i32_0 : i32, i32, i32
  }
  func.func @transform_13(%arg0: i32) -> (i32, i32, i32) {
    %c0_i32 = arith.constant 0 : i32
    %c0_i32_0 = arith.constant 0 : i32
    %c0_i32_1 = arith.constant 0 : i32
    return %arg0, %c0_i32, %c0_i32_0 : i32, i32, i32
  }
  func.func @transform_14(%arg0: i32) -> (i32, i32, i32) {
    %c0_i32 = arith.constant 0 : i32
    %c0_i32_0 = arith.constant 0 : i32
    %c0_i32_1 = arith.constant 0 : i32
    return %arg0, %c0_i32, %c0_i32_0 : i32, i32, i32
  }
  func.func @transform_15(%arg0: i32) -> (i32, i32, i32) {
    %c0_i32 = arith.constant 0 : i32
    %c0_i32_0 = arith.constant 0 : i32
    %c0_i32_1 = arith.constant 0 : i32
    return %arg0, %c0_i32, %c0_i32_0 : i32, i32, i32
  }
  func.func @transform_16(%arg0: i32) -> (i32, i32, i32) {
    %c0_i32 = arith.constant 0 : i32
    %c0_i32_0 = arith.constant 0 : i32
    %c0_i32_1 = arith.constant 0 : i32
    return %arg0, %c0_i32, %c0_i32_0 : i32, i32, i32
  }
  func.func @transform_17(%arg0: i32) -> (i32, i32, i32) {
    %c0_i32 = arith.constant 0 : i32
    %c0_i32_0 = arith.constant 0 : i32
    %c0_i32_1 = arith.constant 0 : i32
    return %arg0, %c0_i32, %c0_i32_0 : i32, i32, i32
  }
  func.func @transform_18(%arg0: i32) -> (i32, i32, i32) {
    %c0_i32 = arith.constant 0 : i32
    %c0_i32_0 = arith.constant 0 : i32
    %c0_i32_1 = arith.constant 0 : i32
    return %arg0, %c0_i32, %c0_i32_0 : i32, i32, i32
  }
  func.func @transform_19(%arg0: i32) -> (i32, i32, i32) {
    %c0_i32 = arith.constant 0 : i32
    %c0_i32_0 = arith.constant 0 : i32
    %c0_i32_1 = arith.constant 0 : i32
    return %arg0, %c0_i32, %c0_i32_0 : i32, i32, i32
  }
  func.func @transform_20(%arg0: i32) -> (i32, i32) {
    %c0_i32 = arith.constant 0 : i32
    %c0_i32_0 = arith.constant 0 : i32
    %c0_i32_1 = arith.constant 0 : i32
    return %c0_i32, %c0_i32_0 : i32, i32
  }
  func.func @transform_21(%arg0: i32) -> (i32, i32) {
    %c0_i32 = arith.constant 0 : i32
    %c0_i32_0 = arith.constant 0 : i32
    %c0_i32_1 = arith.constant 0 : i32
    return %c0_i32, %c0_i32_0 : i32, i32
  }
  func.func @transform_22(%arg0: i32) -> (i32, i32) {
    %c0_i32 = arith.constant 0 : i32
    %c0_i32_0 = arith.constant 0 : i32
    %c0_i32_1 = arith.constant 0 : i32
    return %c0_i32, %c0_i32_0 : i32, i32
  }
  func.func @transform_23(%arg0: i32) -> (i32, i32) {
    %c0_i32 = arith.constant 0 : i32
    %c0_i32_0 = arith.constant 0 : i32
    %c0_i32_1 = arith.constant 0 : i32
    return %c0_i32, %c0_i32_0 : i32, i32
  }
  func.func @transform_24(%arg0: i32) -> (i32, i32) {
    %c0_i32 = arith.constant 0 : i32
    %c0_i32_0 = arith.constant 0 : i32
    %c0_i32_1 = arith.constant 0 : i32
    return %c0_i32, %c0_i32_0 : i32, i32
  }
  func.func @transform_25(%arg0: i32) -> (i32, i32) {
    %c0_i32 = arith.constant 0 : i32
    %c0_i32_0 = arith.constant 0 : i32
    %c0_i32_1 = arith.constant 0 : i32
    return %c0_i32, %c0_i32_0 : i32, i32
  }
  func.func @transform_26(%arg0: i32) -> (i32, i32) {
    %c0_i32 = arith.constant 0 : i32
    %c0_i32_0 = arith.constant 0 : i32
    %c0_i32_1 = arith.constant 0 : i32
    return %c0_i32, %c0_i32_0 : i32, i32
  }
}

</mosaic_0001>

<llo_original>
// kernel: tpu_custom_call.1
$region0: #{tpu_custom_call.1}
  #allocation0 [shape = 'u32[]', space=smem, size = 0x4, offset = 0x4, fixed_abs, tag = 'smem constant byte address 0x4 - core index']
  #allocation1 [shape = 'u32[144,128]{1,0:T(1,128)}', space=vmem, size = 0x12000, scoped, tag = 'internal scratch']
  #allocation2 [shape = 'f32[16,128]{1,0:T(8,128)}', space=vmem, size = 0x2000, scoped, tag = 'scratch operand']
  #allocation3 [shape = 'f32[32,128]{1,0:T(8,128)}', space=vmem, size = 0x4000, scoped, tag = 'scratch operand']
  #allocation4 [shape = 'f32[1,1]{1,0:T(1,128)S(1)}', space=vmem, size = 0x200, scoped, tag = 'scoped memory for tpu_custom_call.1']
  %s0 = inlined_call_operand.hbm [shape: bf16[16,40], index: 0, kind: input, shape index: {}]
  %s1 = inlined_call_operand.vmem [shape: bf16[32,10], index: 1, kind: input, shape index: {}]
  %s2 = inlined_call_operand.vmem [shape: s32[32,1], index: 2, kind: input, shape index: {}]
  %s3 = inlined_call_operand.hbm [shape: s32[1,32], index: 3, kind: input, shape index: {}]
  %s4 = inlined_call_operand.hbm [shape: s32[1,16], index: 4, kind: input, shape index: {}]
  %s5 = inlined_call_operand.vmem [shape: f32[32,1], index: 5, kind: input, shape index: {}]
  %s6 = inlined_call_operand.vmem [shape: f32[16,1], index: 6, kind: input, shape index: {}]
  %s7 = inlined_call_operand.hbm [shape: bf16[40,128], index: 7, kind: input, shape index: {}]
  %s8 = inlined_call_operand.hbm [shape: f32[1,128], index: 8, kind: input, shape index: {}]
  %s9 = inlined_call_operand.hbm [shape: bf16[10,128], index: 9, kind: input, shape index: {}]
  %s10 = inlined_call_operand.hbm [shape: f32[1,128], index: 10, kind: input, shape index: {}]
  %s11 = inlined_call_operand.vmem [shape: bf16[4,128,128], index: 11, kind: input, shape index: {}]
  %s12 = inlined_call_operand.hbm [shape: f32[4,1,128], index: 12, kind: input, shape index: {}]
  %s13 = inlined_call_operand.hbm [shape: f32[4,1,128], index: 13, kind: input, shape index: {}]
  %s14 = inlined_call_operand.hbm [shape: bf16[4,128,256], index: 14, kind: input, shape index: {}]
  %s15 = inlined_call_operand.hbm [shape: f32[4,1,256], index: 15, kind: input, shape index: {}]
  %s16 = inlined_call_operand.hbm [shape: bf16[4,256,128], index: 16, kind: input, shape index: {}]
  %s17 = inlined_call_operand.hbm [shape: f32[4,1,128], index: 17, kind: input, shape index: {}]
  %s18 = inlined_call_operand.hbm [shape: f32[4,1,128], index: 18, kind: input, shape index: {}]
  %s19 = inlined_call_operand.hbm [shape: f32[4,1,128], index: 19, kind: input, shape index: {}]
  %s20 = inlined_call_operand.vmem [shape: bf16[128,64], index: 20, kind: input, shape index: {}]
  %s21 = inlined_call_operand.vmem [shape: f32[1,64], index: 21, kind: input, shape index: {}]
  %s22 = inlined_call_operand.vmem [shape: bf16[64,64], index: 22, kind: input, shape index: {}]
  %s23 = inlined_call_operand.vmem [shape: f32[1,64], index: 23, kind: input, shape index: {}]
  %s24 = inlined_call_operand.vmem [shape: bf16[64,1], index: 24, kind: input, shape index: {}]
  %s25 = inlined_call_operand.<no memory space> [shape: f32[1,1], index: 25, kind: input, shape index: {}]
  %s26 = inlined_call_operand.vmem [shape: f32[2,1], index: 26, kind: output, shape index: {}]
  %s27 = sld [smem:[#allocation0]]
  $region209: #{tpu_custom_call.1} parent=0
    _
  %s29 = ssub.s32 1, %s27
  %s30 = scalar_select 0, %s29, %s27
  %v31 = vstv %s25
  %32 = vst [vmem:[#allocation4] sm:$0x1] %v31
  $region1: #{tpu_custom_call.1} parent=0
    #allocation5 [shape = 'u8[4096]{0}', space=vmem, size = 0x1000, scoped, tag = 'input window, operand 0, single buffered']
    #allocation6 [shape = 's32[2]{0}', space=sflag, size = 0x8, scoped, tag = 'scoped memory for tpu_custom_call.1']
    #allocation7 [shape = 'u8[512]{0}', space=vmem, size = 0x400, scoped, tag = 'input window, operand 3, single buffered']
    #allocation8 [shape = 's32[1]{0}', space=sflag, size = 0x4, scoped, tag = 'scoped memory for tpu_custom_call.1']
    #allocation9 [shape = 'u8[512]{0}', space=vmem, size = 0x400, scoped, tag = 'input window, operand 4, single buffered']
    #allocation10 [shape = 'u8[10240]{0}', space=vmem, size = 0x2800, scoped, tag = 'input window, operand 7, single buffered']
    #allocation11 [shape = 's32[1]{0}', space=sflag, size = 0x4, scoped, tag = 'scoped memory for tpu_custom_call.1']
    #allocation12 [shape = 'u8[512]{0}', space=vmem, size = 0x400, scoped, tag = 'input window, operand 8, single buffered']
    #allocation13 [shape = 'u8[4096]{0}', space=vmem, size = 0x1000, scoped, tag = 'input window, operand 9, single buffered']
    #allocation14 [shape = 's32[1]{0}', space=sflag, size = 0x4, scoped, tag = 'scoped memory for tpu_custom_call.1']
    #allocation15 [shape = 'u8[512]{0}', space=vmem, size = 0x400, scoped, tag = 'input window, operand 10, single buffered']
    #allocation16 [shape = 'u8[1024]{0}', space=vmem, size = 0x400, scoped, tag = 'input window, operand 12']
    #allocation17 [shape = 's32[2]{0}', space=sflag, size = 0x8, scoped, tag = 'scoped memory for tpu_custom_call.1']
    #allocation18 [shape = 'u8[1024]{0}', space=vmem, size = 0x400, scoped, tag = 'input window, operand 13']
    #allocation19 [shape = 'u8[131072]{0}', space=vmem, size = 0x20000, scoped, tag = 'input window, operand 14']
    #allocation20 [shape = 's32[2]{0}', space=sflag, size = 0x8, scoped, tag = 'scoped memory for tpu_custom_call.1']
    #allocation21 [shape = 'u8[2048]{0}', space=vmem, size = 0x800, scoped, tag = 'input window, operand 15']
    #allocation22 [shape = 'u8[131072]{0}', space=vmem, size = 0x20000, scoped, tag = 'input window, operand 16']
    #allocation23 [shape = 's32[2]{0}', space=sflag, size = 0x8, scoped, tag = 'scoped memory for tpu_custom_call.1']
    #allocation24 [shape = 'u8[1024]{0}', space=vmem, size = 0x400, scoped, tag = 'input window, operand 17']
    #allocation25 [shape = 'u8[1024]{0}', space=vmem, size = 0x400, scoped, tag = 'input window, operand 18']
    #allocation26 [shape = 's32[2]{0}', space=sflag, size = 0x8, scoped, tag = 'scoped memory for tpu_custom_call.1']
    #allocation27 [shape = 'u8[1024]{0}', space=vmem, size = 0x400, scoped, tag = 'input window, operand 19']
    %33 = vsyncpa [#allocation6], 0
    %34 = vsyncpa [#allocation8], 0
    %35 = vsyncpa [#allocation11], 0
    %36 = vsyncpa [#allocation14], 0
    %37 = vsyncpa [#allocation17], 0
    %s38 = scalar_lea.sflag [#allocation17], 1
    %39 = vsyncpa %s38, 0
    %40 = vsyncpa [#allocation20], 0
    %s41 = scalar_lea.sflag [#allocation20], 1
    %42 = vsyncpa %s41, 0
    %43 = vsyncpa [#allocation23], 0
    %s44 = scalar_lea.sflag [#allocation23], 1
    %45 = vsyncpa %s44, 0
    %46 = vsyncpa [#allocation26], 0
    %s47 = scalar_lea.sflag [#allocation26], 1
    %48 = vsyncpa %s47, 0
    loop: start=0, step=1, limit=6
    $region2: #{tpu_custom_call.1} parent=1 // loop_pre_header
      _
    $region3: #{tpu_custom_call.1} parent=1 // loop_header
      %s50 = sphi 0, %s54
      %p51 = scmp.ge.s32.totalorder %s50, 6
      %s58 = sphi 0, %s58
      %s60 = sphi 0, %s58
      %s61 = sphi 0, %s60
      %s75 = sphi 0, %s61
      %s79 = sphi 0, %s79
      %s81 = sphi 0, %s79
      %s82 = sphi 0, %s81
      %s96 = sphi 0, %s82
      %s100 = sphi 0, %s100
      %s102 = sphi 0, %s100
      %s103 = sphi 0, %s102
      %s117 = sphi 0, %s103
      %s121 = sphi 0, %s121
      %s123 = sphi 0, %s121
      %s124 = sphi 0, %s123
      %s138 = sphi 0, %s124
      %s142 = sphi 0, %s142
      %s144 = sphi 0, %s142
      %s145 = sphi 0, %s144
      %s159 = sphi 0, %s145
      %s163 = sphi 0, %s163
      %s165 = sphi 0, %s163
      %s166 = sphi 0, %s165
      %s180 = sphi 0, %s166
      %s184 = sphi 0, %s184
      %s186 = sphi 0, %s184
      %s187 = sphi 0, %s186
      %s201 = sphi 0, %s187
      %s205 = sphi 0, %s205
      %s207 = sphi 0, %s205
      %s208 = sphi 0, %s207
      %s222 = sphi 0, %s208
      %s226 = sphi 0, %s226
      %s228 = sphi 0, %s226
      %s229 = sphi 0, %s228
      %s243 = sphi 0, %s229
      %s247 = sphi 0, %s247
      %s249 = sphi 0, %s247
      %s250 = sphi 0, %s249
      %s264 = sphi 0, %s250
      %s268 = sphi 0, %s268
      %s270 = sphi 0, %s268
      %s271 = sphi 0, %s270
      %s285 = sphi 0, %s271
      %s291 = sphi 0, %s293
      %s294 = sphi 0, %s291
      %s295 = sphi 0, %s294
      %s311 = sphi 0, %s295
      %s317 = sphi 0, %s319
      %s320 = sphi 0, %s317
      %s321 = sphi 0, %s320
      %s337 = sphi 0, %s321
      %s343 = sphi 0, %s345
      %s346 = sphi 0, %s343
      %s347 = sphi 0, %s346
      %s363 = sphi 0, %s347
      %s369 = sphi 0, %s371
      %s372 = sphi 0, %s369
      %s373 = sphi 0, %s372
      %s389 = sphi 0, %s373
      %s395 = sphi 0, %s397
      %s398 = sphi 0, %s395
      %s399 = sphi 0, %s398
      %s415 = sphi 0, %s399
      %s421 = sphi 0, %s423
      %s424 = sphi 0, %s421
      %s425 = sphi 0, %s424
      %s441 = sphi 0, %s425
      %s447 = sphi 0, %s449
      %s450 = sphi 0, %s447
      %s451 = sphi 0, %s450
      %s467 = sphi 0, %s451
      %s473 = sphi 0, %s475
      %s476 = sphi 0, %s473
      %s477 = sphi 0, %s476
      %s493 = sphi 0, %s477
      %s499 = sphi 0, %s501
      %s502 = sphi 0, %s499
      %s503 = sphi 0, %s502
      %s519 = sphi 0, %s503
      %s523 = sphi 0, %s523
      %s525 = sphi 0, %s523
      %s526 = sphi 0, %s525
      %s540 = sphi 0, %s526
      %s544 = sphi 0, %s544
      %s546 = sphi 0, %s544
      %s547 = sphi 0, %s546
      %s561 = sphi 0, %s547
      %s565 = sphi 0, %s565
      %s567 = sphi 0, %s565
      %s568 = sphi 0, %s567
      %s582 = sphi 0, %s568
      %s586 = sphi 0, %s586
      %s588 = sphi 0, %s586
      %s589 = sphi 0, %s588
      %s603 = sphi 0, %s589
      %s607 = sphi 0, %s607
      %s609 = sphi 0, %s607
      %s610 = sphi 0, %s609
      %s624 = sphi 0, %s610
      %s628 = sphi 0, %s628
      %s630 = sphi 0, %s628
      %s631 = sphi 0, %s630
      %s645 = sphi 0, %s631
      %s649 = sphi 0, %s649
      %s651 = sphi 0, %s649
      %s652 = sphi 0, %s651
      %s666 = sphi 0, %s652
    $region4: #{tpu_custom_call.1} parent=1 // loop_header_branch
      %53 = sbr.rel (%p51) target = $region8
    $region5: #{tpu_custom_call.1} parent=1 // loop_body
      %s55 = ssub.s32 %s50, 1
      %s56 = ssub.s32 %s50, 2
      %s57 = sadd.s32 %s50, 1
      %s59 = sadd.s32 %s58, 1
      %p62 = scmp.eq.s32.totalorder %s50, 3
      %p63 = scmp.ne.s32.totalorder %s58, %s60
      %p64 = scmp.eq.s32.totalorder %s50, 0
      %p65 = por %p63, %p64
      %p66 = scmp.ne.s32.totalorder %s58, %s60
      %p67 = scmp.eq.s32.totalorder %s55, 3
      %p68 = por %p66, %p67
      %p69 = scmp.ne.s32.totalorder %s60, %s61
      %p70 = scmp.eq.s32.totalorder %s55, 0
      %p71 = por %p69, %p70
      %p72 = scmp.ne.s32.totalorder %s60, %s61
      %p73 = scmp.eq.s32.totalorder %s56, 3
      %p74 = por %p72, %p73
      %p76 = scmp.ne.s32.totalorder %s61, %s75
      %p77 = scmp.eq.s32.totalorder %s56, 0
      %p78 = por %p76, %p77
      %s80 = sadd.s32 %s79, 1
      %p83 = scmp.eq.s32.totalorder %s50, 3
      %p84 = scmp.ne.s32.totalorder %s79, %s81
      %p85 = scmp.eq.s32.totalorder %s50, 0
      %p86 = por %p84, %p85
      %p87 = scmp.ne.s32.totalorder %s79, %s81
      %p88 = scmp.eq.s32.totalorder %s55, 3
      %p89 = por %p87, %p88
      %p90 = scmp.ne.s32.totalorder %s81, %s82
      %p91 = scmp.eq.s32.totalorder %s55, 0
      %p92 = por %p90, %p91
      %p93 = scmp.ne.s32.totalorder %s81, %s82
      %p94 = scmp.eq.s32.totalorder %s56, 3
      %p95 = por %p93, %p94
      %p97 = scmp.ne.s32.totalorder %s82, %s96
      %p98 = scmp.eq.s32.totalorder %s56, 0
      %p99 = por %p97, %p98
      %s101 = sadd.s32 %s100, 1
      %p104 = scmp.eq.s32.totalorder %s50, 3
      %p105 = scmp.ne.s32.totalorder %s100, %s102
      %p106 = scmp.eq.s32.totalorder %s50, 0
      %p107 = por %p105, %p106
      %p108 = scmp.ne.s32.totalorder %s100, %s102
      %p109 = scmp.eq.s32.totalorder %s55, 3
      %p110 = por %p108, %p109
      %p111 = scmp.ne.s32.totalorder %s102, %s103
      %p112 = scmp.eq.s32.totalorder %s55, 0
      %p113 = por %p111, %p112
      %p114 = scmp.ne.s32.totalorder %s102, %s103
      %p115 = scmp.eq.s32.totalorder %s56, 3
      %p116 = por %p114, %p115
      %p118 = scmp.ne.s32.totalorder %s103, %s117
      %p119 = scmp.eq.s32.totalorder %s56, 0
      %p120 = por %p118, %p119
      %s122 = sadd.s32 %s121, 1
      %p125 = scmp.eq.s32.totalorder %s50, 3
      %p126 = scmp.ne.s32.totalorder %s121, %s123
      %p127 = scmp.eq.s32.totalorder %s50, 0
      %p128 = por %p126, %p127
      %p129 = scmp.ne.s32.totalorder %s121, %s123
      %p130 = scmp.eq.s32.totalorder %s55, 3
      %p131 = por %p129, %p130
      %p132 = scmp.ne.s32.totalorder %s123, %s124
      %p133 = scmp.eq.s32.totalorder %s55, 0
      %p134 = por %p132, %p133
      %p135 = scmp.ne.s32.totalorder %s123, %s124
      %p136 = scmp.eq.s32.totalorder %s56, 3
      %p137 = por %p135, %p136
      %p139 = scmp.ne.s32.totalorder %s124, %s138
      %p140 = scmp.eq.s32.totalorder %s56, 0
      %p141 = por %p139, %p140
      %s143 = sadd.s32 %s142, 1
      %p146 = scmp.eq.s32.totalorder %s50, 3
      %p147 = scmp.ne.s32.totalorder %s142, %s144
      %p148 = scmp.eq.s32.totalorder %s50, 0
      %p149 = por %p147, %p148
      %p150 = scmp.ne.s32.totalorder %s142, %s144
      %p151 = scmp.eq.s32.totalorder %s55, 3
      %p152 = por %p150, %p151
      %p153 = scmp.ne.s32.totalorder %s144, %s145
      %p154 = scmp.eq.s32.totalorder %s55, 0
      %p155 = por %p153, %p154
      %p156 = scmp.ne.s32.totalorder %s144, %s145
      %p157 = scmp.eq.s32.totalorder %s56, 3
      %p158 = por %p156, %p157
      %p160 = scmp.ne.s32.totalorder %s145, %s159
      %p161 = scmp.eq.s32.totalorder %s56, 0
      %p162 = por %p160, %p161
      %s164 = sadd.s32 %s163, 1
      %p167 = scmp.eq.s32.totalorder %s50, 3
      %p168 = scmp.ne.s32.totalorder %s163, %s165
      %p169 = scmp.eq.s32.totalorder %s50, 0
      %p170 = por %p168, %p169
      %p171 = scmp.ne.s32.totalorder %s163, %s165
      %p172 = scmp.eq.s32.totalorder %s55, 3
      %p173 = por %p171, %p172
      %p174 = scmp.ne.s32.totalorder %s165, %s166
      %p175 = scmp.eq.s32.totalorder %s55, 0
      %p176 = por %p174, %p175
      %p177 = scmp.ne.s32.totalorder %s165, %s166
      %p178 = scmp.eq.s32.totalorder %s56, 3
      %p179 = por %p177, %p178
      %p181 = scmp.ne.s32.totalorder %s166, %s180
      %p182 = scmp.eq.s32.totalorder %s56, 0
      %p183 = por %p181, %p182
      %s185 = sadd.s32 %s184, 1
      %p188 = scmp.eq.s32.totalorder %s50, 3
      %p189 = scmp.ne.s32.totalorder %s184, %s186
      %p190 = scmp.eq.s32.totalorder %s50, 0
      %p191 = por %p189, %p190
      %p192 = scmp.ne.s32.totalorder %s184, %s186
      %p193 = scmp.eq.s32.totalorder %s55, 3
      %p194 = por %p192, %p193
      %p195 = scmp.ne.s32.totalorder %s186, %s187
      %p196 = scmp.eq.s32.totalorder %s55, 0
      %p197 = por %p195, %p196
      %p198 = scmp.ne.s32.totalorder %s186, %s187
      %p199 = scmp.eq.s32.totalorder %s56, 3
      %p200 = por %p198, %p199
      %p202 = scmp.ne.s32.totalorder %s187, %s201
      %p203 = scmp.eq.s32.totalorder %s56, 0
      %p204 = por %p202, %p203
      %s206 = sadd.s32 %s205, 1
      %p209 = scmp.eq.s32.totalorder %s50, 3
      %p210 = scmp.ne.s32.totalorder %s205, %s207
      %p211 = scmp.eq.s32.totalorder %s50, 0
      %p212 = por %p210, %p211
      %p213 = scmp.ne.s32.totalorder %s205, %s207
      %p214 = scmp.eq.s32.totalorder %s55, 3
      %p215 = por %p213, %p214
      %p216 = scmp.ne.s32.totalorder %s207, %s208
      %p217 = scmp.eq.s32.totalorder %s55, 0
      %p218 = por %p216, %p217
      %p219 = scmp.ne.s32.totalorder %s207, %s208
      %p220 = scmp.eq.s32.totalorder %s56, 3
      %p221 = por %p219, %p220
      %p223 = scmp.ne.s32.totalorder %s208, %s222
      %p224 = scmp.eq.s32.totalorder %s56, 0
      %p225 = por %p223, %p224
      %s227 = sadd.s32 %s226, 1
      %p230 = scmp.eq.s32.totalorder %s50, 3
      %p231 = scmp.ne.s32.totalorder %s226, %s228
      %p232 = scmp.eq.s32.totalorder %s50, 0
      %p233 = por %p231, %p232
      %p234 = scmp.ne.s32.totalorder %s226, %s228
      %p235 = scmp.eq.s32.totalorder %s55, 3
      %p236 = por %p234, %p235
      %p237 = scmp.ne.s32.totalorder %s228, %s229
      %p238 = scmp.eq.s32.totalorder %s55, 0
      %p239 = por %p237, %p238
      %p240 = scmp.ne.s32.totalorder %s228, %s229
      %p241 = scmp.eq.s32.totalorder %s56, 3
      %p242 = por %p240, %p241
      %p244 = scmp.ne.s32.totalorder %s229, %s243
      %p245 = scmp.eq.s32.totalorder %s56, 0
      %p246 = por %p244, %p245
      %s248 = sadd.s32 %s247, 1
      %p251 = scmp.eq.s32.totalorder %s50, 3
      %p252 = scmp.ne.s32.totalorder %s247, %s249
      %p253 = scmp.eq.s32.totalorder %s50, 0
      %p254 = por %p252, %p253
      %p255 = scmp.ne.s32.totalorder %s247, %s249
      %p256 = scmp.eq.s32.totalorder %s55, 3
      %p257 = por %p255, %p256
      %p258 = scmp.ne.s32.totalorder %s249, %s250
      %p259 = scmp.eq.s32.totalorder %s55, 0
      %p260 = por %p258, %p259
      %p261 = scmp.ne.s32.totalorder %s249, %s250
      %p262 = scmp.eq.s32.totalorder %s56, 3
      %p263 = por %p261, %p262
      %p265 = scmp.ne.s32.totalorder %s250, %s264
      %p266 = scmp.eq.s32.totalorder %s56, 0
      %p267 = por %p265, %p266
      %s269 = sadd.s32 %s268, 1
      %p272 = scmp.eq.s32.totalorder %s50, 3
      %p273 = scmp.ne.s32.totalorder %s268, %s270
      %p274 = scmp.eq.s32.totalorder %s50, 0
      %p275 = por %p273, %p274
      %p276 = scmp.ne.s32.totalorder %s268, %s270
      %p277 = scmp.eq.s32.totalorder %s55, 3
      %p278 = por %p276, %p277
      %p279 = scmp.ne.s32.totalorder %s270, %s271
      %p280 = scmp.eq.s32.totalorder %s55, 0
      %p281 = por %p279, %p280
      %p282 = scmp.ne.s32.totalorder %s270, %s271
      %p283 = scmp.eq.s32.totalorder %s56, 3
      %p284 = por %p282, %p283
      %p286 = scmp.ne.s32.totalorder %s271, %s285
      %p287 = scmp.eq.s32.totalorder %s56, 0
      %p288 = por %p286, %p287
      %s289 = ssub.s32 %s50, %s57
      %p290 = scmp.eq.s32.totalorder %s289, 0
      %s292 = sadd.s32 %s291, 1
      %s293 = scalar_select %p290, %s291, %s292
      %p296 = pneg %p290
      %p297 = scmp.eq.s32.totalorder %s50, 3
      %p298 = por %p296, %p297
      %p299 = scmp.ne.s32.totalorder %s291, %s294
      %p300 = scmp.eq.s32.totalorder %s50, 0
      %p301 = por %p299, %p300
      %p302 = scmp.ne.s32.totalorder %s291, %s294
      %p303 = scmp.eq.s32.totalorder %s55, 3
      %p304 = por %p302, %p303
      %p305 = scmp.ne.s32.totalorder %s294, %s295
      %p306 = scmp.eq.s32.totalorder %s55, 0
      %p307 = por %p305, %p306
      %p308 = scmp.ne.s32.totalorder %s294, %s295
      %p309 = scmp.eq.s32.totalorder %s56, 3
      %p310 = por %p308, %p309
      %p312 = scmp.ne.s32.totalorder %s295, %s311
      %p313 = scmp.eq.s32.totalorder %s56, 0
      %p314 = por %p312, %p313
      %s315 = ssub.s32 %s50, %s57
      %p316 = scmp.eq.s32.totalorder %s315, 0
      %s318 = sadd.s32 %s317, 1
      %s319 = scalar_select %p316, %s317, %s318
      %p322 = pneg %p316
      %p323 = scmp.eq.s32.totalorder %s50, 3
      %p324 = por %p322, %p323
      %p325 = scmp.ne.s32.totalorder %s317, %s320
      %p326 = scmp.eq.s32.totalorder %s50, 0
      %p327 = por %p325, %p326
      %p328 = scmp.ne.s32.totalorder %s317, %s320
      %p329 = scmp.eq.s32.totalorder %s55, 3
      %p330 = por %p328, %p329
      %p331 = scmp.ne.s32.totalorder %s320, %s321
      %p332 = scmp.eq.s32.totalorder %s55, 0
      %p333 = por %p331, %p332
      %p334 = scmp.ne.s32.totalorder %s320, %s321
      %p335 = scmp.eq.s32.totalorder %s56, 3
      %p336 = por %p334, %p335
      %p338 = scmp.ne.s32.totalorder %s321, %s337
      %p339 = scmp.eq.s32.totalorder %s56, 0
      %p340 = por %p338, %p339
      %s341 = ssub.s32 %s50, %s57
      %p342 = scmp.eq.s32.totalorder %s341, 0
      %s344 = sadd.s32 %s343, 1
      %s345 = scalar_select %p342, %s343, %s344
      %p348 = pneg %p342
      %p349 = scmp.eq.s32.totalorder %s50, 3
      %p350 = por %p348, %p349
      %p351 = scmp.ne.s32.totalorder %s343, %s346
      %p352 = scmp.eq.s32.totalorder %s50, 0
      %p353 = por %p351, %p352
      %p354 = scmp.ne.s32.totalorder %s343, %s346
      %p355 = scmp.eq.s32.totalorder %s55, 3
      %p356 = por %p354, %p355
      %p357 = scmp.ne.s32.totalorder %s346, %s347
      %p358 = scmp.eq.s32.totalorder %s55, 0
      %p359 = por %p357, %p358
      %p360 = scmp.ne.s32.totalorder %s346, %s347
      %p361 = scmp.eq.s32.totalorder %s56, 3
      %p362 = por %p360, %p361
      %p364 = scmp.ne.s32.totalorder %s347, %s363
      %p365 = scmp.eq.s32.totalorder %s56, 0
      %p366 = por %p364, %p365
      %s367 = ssub.s32 %s50, %s57
      %p368 = scmp.eq.s32.totalorder %s367, 0
      %s370 = sadd.s32 %s369, 1
      %s371 = scalar_select %p368, %s369, %s370
      %p374 = pneg %p368
      %p375 = scmp.eq.s32.totalorder %s50, 3
      %p376 = por %p374, %p375
      %p377 = scmp.ne.s32.totalorder %s369, %s372
      %p378 = scmp.eq.s32.totalorder %s50, 0
      %p379 = por %p377, %p378
      %p380 = scmp.ne.s32.totalorder %s369, %s372
      %p381 = scmp.eq.s32.totalorder %s55, 3
      %p382 = por %p380, %p381
      %p383 = scmp.ne.s32.totalorder %s372, %s373
      %p384 = scmp.eq.s32.totalorder %s55, 0
      %p385 = por %p383, %p384
      %p386 = scmp.ne.s32.totalorder %s372, %s373
      %p387 = scmp.eq.s32.totalorder %s56, 3
      %p388 = por %p386, %p387
      %p390 = scmp.ne.s32.totalorder %s373, %s389
      %p391 = scmp.eq.s32.totalorder %s56, 0
      %p392 = por %p390, %p391
      %s393 = ssub.s32 %s50, %s57
      %p394 = scmp.eq.s32.totalorder %s393, 0
      %s396 = sadd.s32 %s395, 1
      %s397 = scalar_select %p394, %s395, %s396
      %p400 = pneg %p394
      %p401 = scmp.eq.s32.totalorder %s50, 3
      %p402 = por %p400, %p401
      %p403 = scmp.ne.s32.totalorder %s395, %s398
      %p404 = scmp.eq.s32.totalorder %s50, 0
      %p405 = por %p403, %p404
      %p406 = scmp.ne.s32.totalorder %s395, %s398
      %p407 = scmp.eq.s32.totalorder %s55, 3
      %p408 = por %p406, %p407
      %p409 = scmp.ne.s32.totalorder %s398, %s399
      %p410 = scmp.eq.s32.totalorder %s55, 0
      %p411 = por %p409, %p410
      %p412 = scmp.ne.s32.totalorder %s398, %s399
      %p413 = scmp.eq.s32.totalorder %s56, 3
      %p414 = por %p412, %p413
      %p416 = scmp.ne.s32.totalorder %s399, %s415
      %p417 = scmp.eq.s32.totalorder %s56, 0
      %p418 = por %p416, %p417
      %s419 = ssub.s32 %s50, %s57
      %p420 = scmp.eq.s32.totalorder %s419, 0
      %s422 = sadd.s32 %s421, 1
      %s423 = scalar_select %p420, %s421, %s422
      %p426 = pneg %p420
      %p427 = scmp.eq.s32.totalorder %s50, 3
      %p428 = por %p426, %p427
      %p429 = scmp.ne.s32.totalorder %s421, %s424
      %p430 = scmp.eq.s32.totalorder %s50, 0
      %p431 = por %p429, %p430
      %p432 = scmp.ne.s32.totalorder %s421, %s424
      %p433 = scmp.eq.s32.totalorder %s55, 3
      %p434 = por %p432, %p433
      %p435 = scmp.ne.s32.totalorder %s424, %s425
      %p436 = scmp.eq.s32.totalorder %s55, 0
      %p437 = por %p435, %p436
      %p438 = scmp.ne.s32.totalorder %s424, %s425
      %p439 = scmp.eq.s32.totalorder %s56, 3
      %p440 = por %p438, %p439
      %p442 = scmp.ne.s32.totalorder %s425, %s441
      %p443 = scmp.eq.s32.totalorder %s56, 0
      %p444 = por %p442, %p443
      %s445 = ssub.s32 %s50, %s57
      %p446 = scmp.eq.s32.totalorder %s445, 0
      %s448 = sadd.s32 %s447, 1
      %s449 = scalar_select %p446, %s447, %s448
      %p452 = pneg %p446
      %p453 = scmp.eq.s32.totalorder %s50, 3
      %p454 = por %p452, %p453
      %p455 = scmp.ne.s32.totalorder %s447, %s450
      %p456 = scmp.eq.s32.totalorder %s50, 0
      %p457 = por %p455, %p456
      %p458 = scmp.ne.s32.totalorder %s447, %s450
      %p459 = scmp.eq.s32.totalorder %s55, 3
      %p460 = por %p458, %p459
      %p461 = scmp.ne.s32.totalorder %s450, %s451
      %p462 = scmp.eq.s32.totalorder %s55, 0
      %p463 = por %p461, %p462
      %p464 = scmp.ne.s32.totalorder %s450, %s451
      %p465 = scmp.eq.s32.totalorder %s56, 3
      %p466 = por %p464, %p465
      %p468 = scmp.ne.s32.totalorder %s451, %s467
      %p469 = scmp.eq.s32.totalorder %s56, 0
      %p470 = por %p468, %p469
      %s471 = ssub.s32 %s50, %s57
      %p472 = scmp.eq.s32.totalorder %s471, 0
      %s474 = sadd.s32 %s473, 1
      %s475 = scalar_select %p472, %s473, %s474
      %p478 = pneg %p472
      %p479 = scmp.eq.s32.totalorder %s50, 3
      %p480 = por %p478, %p479
      %p481 = scmp.ne.s32.totalorder %s473, %s476
      %p482 = scmp.eq.s32.totalorder %s50, 0
      %p483 = por %p481, %p482
      %p484 = scmp.ne.s32.totalorder %s473, %s476
      %p485 = scmp.eq.s32.totalorder %s55, 3
      %p486 = por %p484, %p485
      %p487 = scmp.ne.s32.totalorder %s476, %s477
      %p488 = scmp.eq.s32.totalorder %s55, 0
      %p489 = por %p487, %p488
      %p490 = scmp.ne.s32.totalorder %s476, %s477
      %p491 = scmp.eq.s32.totalorder %s56, 3
      %p492 = por %p490, %p491
      %p494 = scmp.ne.s32.totalorder %s477, %s493
      %p495 = scmp.eq.s32.totalorder %s56, 0
      %p496 = por %p494, %p495
      %s497 = ssub.s32 %s50, %s57
      %p498 = scmp.eq.s32.totalorder %s497, 0
      %s500 = sadd.s32 %s499, 1
      %s501 = scalar_select %p498, %s499, %s500
      %p504 = pneg %p498
      %p505 = scmp.eq.s32.totalorder %s50, 3
      %p506 = por %p504, %p505
      %p507 = scmp.ne.s32.totalorder %s499, %s502
      %p508 = scmp.eq.s32.totalorder %s50, 0
      %p509 = por %p507, %p508
      %p510 = scmp.ne.s32.totalorder %s499, %s502
      %p511 = scmp.eq.s32.totalorder %s55, 3
      %p512 = por %p510, %p511
      %p513 = scmp.ne.s32.totalorder %s502, %s503
      %p514 = scmp.eq.s32.totalorder %s55, 0
      %p515 = por %p513, %p514
      %p516 = scmp.ne.s32.totalorder %s502, %s503
      %p517 = scmp.eq.s32.totalorder %s56, 3
      %p518 = por %p516, %p517
      %p520 = scmp.ne.s32.totalorder %s503, %s519
      %p521 = scmp.eq.s32.totalorder %s56, 0
      %p522 = por %p520, %p521
      %s524 = sadd.s32 %s523, 1
      %p527 = scmp.eq.s32.totalorder %s50, 3
      %p528 = scmp.ne.s32.totalorder %s523, %s525
      %p529 = scmp.eq.s32.totalorder %s50, 0
      %p530 = por %p528, %p529
      %p531 = scmp.ne.s32.totalorder %s523, %s525
      %p532 = scmp.eq.s32.totalorder %s55, 3
      %p533 = por %p531, %p532
      %p534 = scmp.ne.s32.totalorder %s525, %s526
      %p535 = scmp.eq.s32.totalorder %s55, 0
      %p536 = por %p534, %p535
      %p537 = scmp.ne.s32.totalorder %s525, %s526
      %p538 = scmp.eq.s32.totalorder %s56, 3
      %p539 = por %p537, %p538
      %p541 = scmp.ne.s32.totalorder %s526, %s540
      %p542 = scmp.eq.s32.totalorder %s56, 0
      %p543 = por %p541, %p542
      %s545 = sadd.s32 %s544, 1
      %p548 = scmp.eq.s32.totalorder %s50, 3
      %p549 = scmp.ne.s32.totalorder %s544, %s546
      %p550 = scmp.eq.s32.totalorder %s50, 0
      %p551 = por %p549, %p550
      %p552 = scmp.ne.s32.totalorder %s544, %s546
      %p553 = scmp.eq.s32.totalorder %s55, 3
      %p554 = por %p552, %p553
      %p555 = scmp.ne.s32.totalorder %s546, %s547
      %p556 = scmp.eq.s32.totalorder %s55, 0
      %p557 = por %p555, %p556
      %p558 = scmp.ne.s32.totalorder %s546, %s547
      %p559 = scmp.eq.s32.totalorder %s56, 3
      %p560 = por %p558, %p559
      %p562 = scmp.ne.s32.totalorder %s547, %s561
      %p563 = scmp.eq.s32.totalorder %s56, 0
      %p564 = por %p562, %p563
      %s566 = sadd.s32 %s565, 1
      %p569 = scmp.eq.s32.totalorder %s50, 3
      %p570 = scmp.ne.s32.totalorder %s565, %s567
      %p571 = scmp.eq.s32.totalorder %s50, 0
      %p572 = por %p570, %p571
      %p573 = scmp.ne.s32.totalorder %s565, %s567
      %p574 = scmp.eq.s32.totalorder %s55, 3
      %p575 = por %p573, %p574
      %p576 = scmp.ne.s32.totalorder %s567, %s568
      %p577 = scmp.eq.s32.totalorder %s55, 0
      %p578 = por %p576, %p577
      %p579 = scmp.ne.s32.totalorder %s567, %s568
      %p580 = scmp.eq.s32.totalorder %s56, 3
      %p581 = por %p579, %p580
      %p583 = scmp.ne.s32.totalorder %s568, %s582
      %p584 = scmp.eq.s32.totalorder %s56, 0
      %p585 = por %p583, %p584
      %s587 = sadd.s32 %s586, 1
      %p590 = scmp.eq.s32.totalorder %s50, 3
      %p591 = scmp.ne.s32.totalorder %s586, %s588
      %p592 = scmp.eq.s32.totalorder %s50, 0
      %p593 = por %p591, %p592
      %p594 = scmp.ne.s32.totalorder %s586, %s588
      %p595 = scmp.eq.s32.totalorder %s55, 3
      %p596 = por %p594, %p595
      %p597 = scmp.ne.s32.totalorder %s588, %s589
      %p598 = scmp.eq.s32.totalorder %s55, 0
      %p599 = por %p597, %p598
      %p600 = scmp.ne.s32.totalorder %s588, %s589
      %p601 = scmp.eq.s32.totalorder %s56, 3
      %p602 = por %p600, %p601
      %p604 = scmp.ne.s32.totalorder %s589, %s603
      %p605 = scmp.eq.s32.totalorder %s56, 0
      %p606 = por %p604, %p605
      %s608 = sadd.s32 %s607, 1
      %p611 = scmp.eq.s32.totalorder %s50, 3
      %p612 = scmp.ne.s32.totalorder %s607, %s609
      %p613 = scmp.eq.s32.totalorder %s50, 0
      %p614 = por %p612, %p613
      %p615 = scmp.ne.s32.totalorder %s607, %s609
      %p616 = scmp.eq.s32.totalorder %s55, 3
      %p617 = por %p615, %p616
      %p618 = scmp.ne.s32.totalorder %s609, %s610
      %p619 = scmp.eq.s32.totalorder %s55, 0
      %p620 = por %p618, %p619
      %p621 = scmp.ne.s32.totalorder %s609, %s610
      %p622 = scmp.eq.s32.totalorder %s56, 3
      %p623 = por %p621, %p622
      %p625 = scmp.ne.s32.totalorder %s610, %s624
      %p626 = scmp.eq.s32.totalorder %s56, 0
      %p627 = por %p625, %p626
      %s629 = sadd.s32 %s628, 1
      %p632 = scmp.eq.s32.totalorder %s50, 3
      %p633 = scmp.ne.s32.totalorder %s628, %s630
      %p634 = scmp.eq.s32.totalorder %s50, 0
      %p635 = por %p633, %p634
      %p636 = scmp.ne.s32.totalorder %s628, %s630
      %p637 = scmp.eq.s32.totalorder %s55, 3
      %p638 = por %p636, %p637
      %p639 = scmp.ne.s32.totalorder %s630, %s631
      %p640 = scmp.eq.s32.totalorder %s55, 0
      %p641 = por %p639, %p640
      %p642 = scmp.ne.s32.totalorder %s630, %s631
      %p643 = scmp.eq.s32.totalorder %s56, 3
      %p644 = por %p642, %p643
      %p646 = scmp.ne.s32.totalorder %s631, %s645
      %p647 = scmp.eq.s32.totalorder %s56, 0
      %p648 = por %p646, %p647
      %s650 = sadd.s32 %s649, 1
      %p653 = scmp.eq.s32.totalorder %s50, 3
      %p654 = scmp.ne.s32.totalorder %s649, %s651
      %p655 = scmp.eq.s32.totalorder %s50, 0
      %p656 = por %p654, %p655
      %p657 = scmp.ne.s32.totalorder %s649, %s651
      %p658 = scmp.eq.s32.totalorder %s55, 3
      %p659 = por %p657, %p658
      %p660 = scmp.ne.s32.totalorder %s651, %s652
      %p661 = scmp.eq.s32.totalorder %s55, 0
      %p662 = por %p660, %p661
      %p663 = scmp.ne.s32.totalorder %s651, %s652
      %p664 = scmp.eq.s32.totalorder %s56, 3
      %p665 = por %p663, %p664
      %p667 = scmp.ne.s32.totalorder %s652, %s666
      %p668 = scmp.eq.s32.totalorder %s56, 0
      %p669 = por %p667, %p668
      %p670 = scmp.le.s32.totalorder 1, %s50
      %p671 = scmp.lt.s32.totalorder %s50, 5
      %p672 = pnand %p670, %p671
      %p673 = pneg %p672
      // Predicated region
      $region9: #{tpu_custom_call.1} parent=5 // pred_check
        _
      $region10: #{tpu_custom_call.1} parent=5 // pred_check_branch
        %675 = sbr.rel (%p672) target = $region12
      $region11: #{tpu_custom_call.1} parent=5 // pred_region
        %s676 = ssub.s32 %s50, 1
        // Predicated region
        $region13: #{tpu_custom_call.1} parent=11 // pred_check
          %p677 = pneg %p71
        $region14: #{tpu_custom_call.1} parent=11 // pred_check_branch
          %679 = sbr.rel (%p677) target = $region16
        $region15: #{tpu_custom_call.1} parent=11 // pred_region
          %s681 = ssub.s32 128, 128
          %682 = vsyncadd [#allocation6], %s681
          %s683 = sshll.u32 [#allocation5], 4
          %s684 = int_to_ptr.vmem [resolvable:$true] %s683
          %689 = dma.hbm_to_vmem [thread:$0]  %s0, 128, %s684, [#allocation6], 64, 64, 4
        $region16: #{tpu_custom_call.1} parent=11 // pred_fallthru
          _
        // Predicated region
        $region17: #{tpu_custom_call.1} parent=11 // pred_check
          %p690 = pneg %p92
        $region18: #{tpu_custom_call.1} parent=11 // pred_check_branch
          %692 = sbr.rel (%p690) target = $region20
        $region19: #{tpu_custom_call.1} parent=11 // pred_region
          _
        $region20: #{tpu_custom_call.1} parent=11 // pred_fallthru
          _
        // Predicated region
        $region21: #{tpu_custom_call.1} parent=11 // pred_check
          %p693 = pneg %p113
        $region22: #{tpu_custom_call.1} parent=11 // pred_check_branch
          %695 = sbr.rel (%p693) target = $region24
        $region23: #{tpu_custom_call.1} parent=11 // pred_region
          _
        $region24: #{tpu_custom_call.1} parent=11 // pred_fallthru
          _
        // Predicated region
        $region25: #{tpu_custom_call.1} parent=11 // pred_check
          %p696 = pneg %p134
        $region26: #{tpu_custom_call.1} parent=11 // pred_check_branch
          %698 = sbr.rel (%p696) target = $region28
        $region27: #{tpu_custom_call.1} parent=11 // pred_region
          %s700 = ssub.s32 16, 16
          %701 = vsyncadd [#allocation8], %s700
          %s703 = sshll.u32 [#allocation7], 4
          %s704 = int_to_ptr.vmem [resolvable:$true] %s703
          %706 = dma.hbm_to_vmem [thread:$0]  %s3, 16, %s704, [#allocation8]
        $region28: #{tpu_custom_call.1} parent=11 // pred_fallthru
          _
        // Predicated region
        $region29: #{tpu_custom_call.1} parent=11 // pred_check
          %p707 = pneg %p155
        $region30: #{tpu_custom_call.1} parent=11 // pred_check_branch
          %709 = sbr.rel (%p707) target = $region32
        $region31: #{tpu_custom_call.1} parent=11 // pred_region
          %s711 = ssub.s32 16, 16
          %712 = vsyncadd [#allocation8], %s711
          %s714 = sshll.u32 [#allocation9], 4
          %s715 = int_to_ptr.vmem [resolvable:$true] %s714
          %717 = dma.hbm_to_vmem [thread:$0]  %s4, 16, %s715, [#allocation8]
        $region32: #{tpu_custom_call.1} parent=11 // pred_fallthru
          _
        // Predicated region
        $region33: #{tpu_custom_call.1} parent=11 // pred_check
          %p718 = pneg %p176
        $region34: #{tpu_custom_call.1} parent=11 // pred_check_branch
          %720 = sbr.rel (%p718) target = $region36
        $region35: #{tpu_custom_call.1} parent=11 // pred_region
          _
        $region36: #{tpu_custom_call.1} parent=11 // pred_fallthru
          _
        // Predicated region
        $region37: #{tpu_custom_call.1} parent=11 // pred_check
          %p721 = pneg %p197
        $region38: #{tpu_custom_call.1} parent=11 // pred_check_branch
          %723 = sbr.rel (%p721) target = $region40
        $region39: #{tpu_custom_call.1} parent=11 // pred_region
          _
        $region40: #{tpu_custom_call.1} parent=11 // pred_fallthru
          _
        // Predicated region
        $region41: #{tpu_custom_call.1} parent=11 // pred_check
          %p724 = pneg %p218
        $region42: #{tpu_custom_call.1} parent=11 // pred_check_branch
          %726 = sbr.rel (%p724) target = $region44
        $region43: #{tpu_custom_call.1} parent=11 // pred_region
          %s728 = ssub.s32 320, 320
          %729 = vsyncadd [#allocation11], %s728
          %s730 = sshll.u32 [#allocation10], 4
          %s731 = int_to_ptr.vmem [resolvable:$true] %s730
          %736 = dma.hbm_to_vmem [thread:$0]  %s7, 320, %s731, [#allocation11], 64, 64, 4
        $region44: #{tpu_custom_call.1} parent=11 // pred_fallthru
          _
        // Predicated region
        $region45: #{tpu_custom_call.1} parent=11 // pred_check
          %p737 = pneg %p239
        $region46: #{tpu_custom_call.1} parent=11 // pred_check_branch
          %739 = sbr.rel (%p737) target = $region48
        $region47: #{tpu_custom_call.1} parent=11 // pred_region
          %s741 = ssub.s32 16, 16
          %742 = vsyncadd [#allocation11], %s741
          %s744 = sshll.u32 [#allocation12], 4
          %s745 = int_to_ptr.vmem [resolvable:$true] %s744
          %747 = dma.hbm_to_vmem [thread:$0]  %s8, 16, %s745, [#allocation11]
        $region48: #{tpu_custom_call.1} parent=11 // pred_fallthru
          _
        // Predicated region
        $region49: #{tpu_custom_call.1} parent=11 // pred_check
          %p748 = pneg %p260
        $region50: #{tpu_custom_call.1} parent=11 // pred_check_branch
          %750 = sbr.rel (%p748) target = $region52
        $region51: #{tpu_custom_call.1} parent=11 // pred_region
          %s752 = ssub.s32 128, 128
          %753 = vsyncadd [#allocation14], %s752
          %s754 = sshll.u32 [#allocation13], 4
          %s755 = int_to_ptr.vmem [resolvable:$true] %s754
          %760 = dma.hbm_to_vmem [thread:$0]  %s9, 128, %s755, [#allocation14], 64, 64, 4
        $region52: #{tpu_custom_call.1} parent=11 // pred_fallthru
          _
        // Predicated region
        $region53: #{tpu_custom_call.1} parent=11 // pred_check
          %p761 = pneg %p281
        $region54: #{tpu_custom_call.1} parent=11 // pred_check_branch
          %763 = sbr.rel (%p761) target = $region56
        $region55: #{tpu_custom_call.1} parent=11 // pred_region
          %s765 = ssub.s32 16, 16
          %766 = vsyncadd [#allocation14], %s765
          %s768 = sshll.u32 [#allocation15], 4
          %s769 = int_to_ptr.vmem [resolvable:$true] %s768
          %771 = dma.hbm_to_vmem [thread:$0]  %s10, 16, %s769, [#allocation14]
        $region56: #{tpu_custom_call.1} parent=11 // pred_fallthru
          _
        // Predicated region
        $region57: #{tpu_custom_call.1} parent=11 // pred_check
          %p772 = pneg %p536
        $region58: #{tpu_custom_call.1} parent=11 // pred_check_branch
          %774 = sbr.rel (%p772) target = $region60
        $region59: #{tpu_custom_call.1} parent=11 // pred_region
          _
        $region60: #{tpu_custom_call.1} parent=11 // pred_fallthru
          _
        // Predicated region
        $region61: #{tpu_custom_call.1} parent=11 // pred_check
          %p775 = pneg %p557
        $region62: #{tpu_custom_call.1} parent=11 // pred_check_branch
          %777 = sbr.rel (%p775) target = $region64
        $region63: #{tpu_custom_call.1} parent=11 // pred_region
          _
        $region64: #{tpu_custom_call.1} parent=11 // pred_fallthru
          _
        // Predicated region
        $region65: #{tpu_custom_call.1} parent=11 // pred_check
          %p778 = pneg %p578
        $region66: #{tpu_custom_call.1} parent=11 // pred_check_branch
          %780 = sbr.rel (%p778) target = $region68
        $region67: #{tpu_custom_call.1} parent=11 // pred_region
          _
        $region68: #{tpu_custom_call.1} parent=11 // pred_fallthru
          _
        // Predicated region
        $region69: #{tpu_custom_call.1} parent=11 // pred_check
          %p781 = pneg %p599
        $region70: #{tpu_custom_call.1} parent=11 // pred_check_branch
          %783 = sbr.rel (%p781) target = $region72
        $region71: #{tpu_custom_call.1} parent=11 // pred_region
          _
        $region72: #{tpu_custom_call.1} parent=11 // pred_fallthru
          _
        // Predicated region
        $region73: #{tpu_custom_call.1} parent=11 // pred_check
          %p784 = pneg %p620
        $region74: #{tpu_custom_call.1} parent=11 // pred_check_branch
          %786 = sbr.rel (%p784) target = $region76
        $region75: #{tpu_custom_call.1} parent=11 // pred_region
          _
        $region76: #{tpu_custom_call.1} parent=11 // pred_fallthru
          _
        // Predicated region
        $region77: #{tpu_custom_call.1} parent=11 // pred_check
          %p787 = pneg %p641
        $region78: #{tpu_custom_call.1} parent=11 // pred_check_branch
          %789 = sbr.rel (%p787) target = $region80
        $region79: #{tpu_custom_call.1} parent=11 // pred_region
          _
        $region80: #{tpu_custom_call.1} parent=11 // pred_fallthru
          _
      $region12: #{tpu_custom_call.1} parent=5 // pred_fallthru
        _
      %p790 = scmp.lt.s32.totalorder %s50, 4
      // Predicated region
      $region81: #{tpu_custom_call.1} parent=5 // pred_check
        %p791 = pneg %p790
      $region82: #{tpu_custom_call.1} parent=5 // pred_check_branch
        %793 = sbr.rel (%p791) target = $region84
      $region83: #{tpu_custom_call.1} parent=5 // pred_region
        // Predicated region
        $region85: #{tpu_custom_call.1} parent=83 // pred_check
          %p794 = pneg %p301
        $region86: #{tpu_custom_call.1} parent=83 // pred_check_branch
          %796 = sbr.rel (%p794) target = $region88
        $region87: #{tpu_custom_call.1} parent=83 // pred_region
          %p797 = scmp.lt.s32.totalorder %s50, 3
          %s798 = scalar_select %p797, %s50, 3
          %s799 = smul.addr %s798, 16
          %s800 = smul.addr %s799, 4
          %s801 = scalar_lea.vmem %s11, %s800
        $region88: #{tpu_custom_call.1} parent=83 // pred_fallthru
          _
        // Predicated region
        $region89: #{tpu_custom_call.1} parent=83 // pred_check
          %p802 = pneg %p327
        $region90: #{tpu_custom_call.1} parent=83 // pred_check_branch
          %804 = sbr.rel (%p802) target = $region92
        $region91: #{tpu_custom_call.1} parent=83 // pred_region
          %s805 = sand.u32 %s50, 1
          %s806 = scalar_lea.sflag [#allocation17], %s805
          %s807 = sand.u32 %s317, 1
          %s808 = scalar_lea.vmem [#allocation16], %s807
          %s810 = ssub.s32 16, 16
          %811 = vsyncadd %s806, %s810
          %s812 = smul.addr %s50, 16
          %s813 = scalar_lea.hbm %s12, %s812
          %s815 = sshll.u32 %s808, 4
          %s816 = int_to_ptr.vmem [resolvable:$true] %s815
          %818 = dma.hbm_to_vmem [thread:$0]  %s813, 16, %s816, %s806
        $region92: #{tpu_custom_call.1} parent=83 // pred_fallthru
          _
        // Predicated region
        $region93: #{tpu_custom_call.1} parent=83 // pred_check
          %p819 = pneg %p353
        $region94: #{tpu_custom_call.1} parent=83 // pred_check_branch
          %821 = sbr.rel (%p819) target = $region96
        $region95: #{tpu_custom_call.1} parent=83 // pred_region
          %s822 = sand.u32 %s50, 1
          %s823 = scalar_lea.sflag [#allocation17], %s822
          %s824 = sand.u32 %s343, 1
          %s825 = scalar_lea.vmem [#allocation18], %s824
          %s827 = ssub.s32 16, 16
          %828 = vsyncadd %s823, %s827
          %s829 = smul.addr %s50, 16
          %s830 = scalar_lea.hbm %s13, %s829
          %s832 = sshll.u32 %s825, 4
          %s833 = int_to_ptr.vmem [resolvable:$true] %s832
          %835 = dma.hbm_to_vmem [thread:$0]  %s830, 16, %s833, %s823
        $region96: #{tpu_custom_call.1} parent=83 // pred_fallthru
          _
        // Predicated region
        $region97: #{tpu_custom_call.1} parent=83 // pred_check
          %p836 = pneg %p379
        $region98: #{tpu_custom_call.1} parent=83 // pred_check_branch
          %838 = sbr.rel (%p836) target = $region100
        $region99: #{tpu_custom_call.1} parent=83 // pred_region
          %s839 = sand.u32 %s50, 1
          %s840 = scalar_lea.sflag [#allocation20], %s839
          %s841 = sand.u32 %s369, 1
          %s842 = smul.addr %s841, 128
          %s843 = scalar_lea.vmem [#allocation19], %s842
          %s845 = ssub.s32 2048, 2048
          %846 = vsyncadd %s840, %s845
          %s847 = smul.addr %s50, 32
          %s848 = smul.addr %s847, 64
          %s849 = scalar_lea.hbm %s14, %s848
          %s850 = sshll.u32 %s843, 4
          %s851 = int_to_ptr.vmem [resolvable:$true] %s850
          %856 = dma.hbm_to_vmem [thread:$0]  %s849, 2048, %s851, %s840, 128, 128, 8
        $region100: #{tpu_custom_call.1} parent=83 // pred_fallthru
          _
        // Predicated region
        $region101: #{tpu_custom_call.1} parent=83 // pred_check
          %p857 = pneg %p405
        $region102: #{tpu_custom_call.1} parent=83 // pred_check_branch
          %859 = sbr.rel (%p857) target = $region104
        $region103: #{tpu_custom_call.1} parent=83 // pred_region
          %s860 = sand.u32 %s50, 1
          %s861 = scalar_lea.sflag [#allocation20], %s860
          %s862 = sand.u32 %s395, 1
          %s863 = smul.addr %s862, 2
          %s864 = scalar_lea.vmem [#allocation21], %s863
          %s866 = ssub.s32 32, 32
          %867 = vsyncadd %s861, %s866
          %s868 = smul.addr %s50, 2
          %s869 = smul.addr %s868, 16
          %s870 = scalar_lea.hbm %s15, %s869
          %s872 = sshll.u32 %s864, 4
          %s873 = int_to_ptr.vmem [resolvable:$true] %s872
          %875 = dma.hbm_to_vmem [thread:$0]  %s870, 32, %s873, %s861
        $region104: #{tpu_custom_call.1} parent=83 // pred_fallthru
          _
        // Predicated region
        $region105: #{tpu_custom_call.1} parent=83 // pred_check
          %p876 = pneg %p431
        $region106: #{tpu_custom_call.1} parent=83 // pred_check_branch
          %878 = sbr.rel (%p876) target = $region108
        $region107: #{tpu_custom_call.1} parent=83 // pred_region
          %s879 = sand.u32 %s50, 1
          %s880 = scalar_lea.sflag [#allocation23], %s879
          %s881 = sand.u32 %s421, 1
          %s882 = smul.addr %s881, 128
          %s883 = scalar_lea.vmem [#allocation22], %s882
          %s885 = ssub.s32 2048, 2048
          %886 = vsyncadd %s880, %s885
          %s887 = smul.addr %s50, 32
          %s888 = smul.addr %s887, 64
          %s889 = scalar_lea.hbm %s16, %s888
          %s890 = sshll.u32 %s883, 4
          %s891 = int_to_ptr.vmem [resolvable:$true] %s890
          %896 = dma.hbm_to_vmem [thread:$0]  %s889, 2048, %s891, %s880, 64, 64, 4
        $region108: #{tpu_custom_call.1} parent=83 // pred_fallthru
          _
        // Predicated region
        $region109: #{tpu_custom_call.1} parent=83 // pred_check
          %p897 = pneg %p457
        $region110: #{tpu_custom_call.1} parent=83 // pred_check_branch
          %899 = sbr.rel (%p897) target = $region112
        $region111: #{tpu_custom_call.1} parent=83 // pred_region
          %s900 = sand.u32 %s50, 1
          %s901 = scalar_lea.sflag [#allocation23], %s900
          %s902 = sand.u32 %s447, 1
          %s903 = scalar_lea.vmem [#allocation24], %s902
          %s905 = ssub.s32 16, 16
          %906 = vsyncadd %s901, %s905
          %s907 = smul.addr %s50, 16
          %s908 = scalar_lea.hbm %s17, %s907
          %s910 = sshll.u32 %s903, 4
          %s911 = int_to_ptr.vmem [resolvable:$true] %s910
          %913 = dma.hbm_to_vmem [thread:$0]  %s908, 16, %s911, %s901
        $region112: #{tpu_custom_call.1} parent=83 // pred_fallthru
          _
        // Predicated region
        $region113: #{tpu_custom_call.1} parent=83 // pred_check
          %p914 = pneg %p483
        $region114: #{tpu_custom_call.1} parent=83 // pred_check_branch
          %916 = sbr.rel (%p914) target = $region116
        $region115: #{tpu_custom_call.1} parent=83 // pred_region
          %s917 = sand.u32 %s50, 1
          %s918 = scalar_lea.sflag [#allocation26], %s917
          %s919 = sand.u32 %s473, 1
          %s920 = scalar_lea.vmem [#allocation25], %s919
          %s922 = ssub.s32 16, 16
          %923 = vsyncadd %s918, %s922
          %s924 = smul.addr %s50, 16
          %s925 = scalar_lea.hbm %s18, %s924
          %s927 = sshll.u32 %s920, 4
          %s928 = int_to_ptr.vmem [resolvable:$true] %s927
          %930 = dma.hbm_to_vmem [thread:$0]  %s925, 16, %s928, %s918
        $region116: #{tpu_custom_call.1} parent=83 // pred_fallthru
          _
        // Predicated region
        $region117: #{tpu_custom_call.1} parent=83 // pred_check
          %p931 = pneg %p509
        $region118: #{tpu_custom_call.1} parent=83 // pred_check_branch
          %933 = sbr.rel (%p931) target = $region120
        $region119: #{tpu_custom_call.1} parent=83 // pred_region
          %s934 = sand.u32 %s50, 1
          %s935 = scalar_lea.sflag [#allocation26], %s934
          %s936 = sand.u32 %s499, 1
          %s937 = scalar_lea.vmem [#allocation27], %s936
          %s939 = ssub.s32 16, 16
          %940 = vsyncadd %s935, %s939
          %s941 = smul.addr %s50, 16
          %s942 = scalar_lea.hbm %s19, %s941
          %s944 = sshll.u32 %s937, 4
          %s945 = int_to_ptr.vmem [resolvable:$true] %s944
          %947 = dma.hbm_to_vmem [thread:$0]  %s942, 16, %s945, %s935
        $region120: #{tpu_custom_call.1} parent=83 // pred_fallthru
          _
      $region84: #{tpu_custom_call.1} parent=5 // pred_fallthru
        _
      %p948 = scmp.le.s32.totalorder 1, %s50
      %p949 = scmp.lt.s32.totalorder %s50, 5
      %p950 = pnand %p948, %p949
      %p951 = pneg %p950
      // Predicated region
      $region121: #{tpu_custom_call.1} parent=5 // pred_check
        _
      $region122: #{tpu_custom_call.1} parent=5 // pred_check_branch
        %953 = sbr.rel (%p950) target = $region124
      $region123: #{tpu_custom_call.1} parent=5 // pred_region
        %s954 = ssub.s32 %s50, 1
        // Predicated region
        $region125: #{tpu_custom_call.1} parent=123 // pred_check
          %p955 = pneg %p71
        $region126: #{tpu_custom_call.1} parent=123 // pred_check_branch
          %957 = sbr.rel (%p955) target = $region128
        $region127: #{tpu_custom_call.1} parent=123 // pred_region
          %958 = dma.done [#allocation6], 128
        $region128: #{tpu_custom_call.1} parent=123 // pred_fallthru
          _
        // Predicated region
        $region129: #{tpu_custom_call.1} parent=123 // pred_check
          %p959 = pneg %p134
        $region130: #{tpu_custom_call.1} parent=123 // pred_check_branch
          %961 = sbr.rel (%p959) target = $region132
        $region131: #{tpu_custom_call.1} parent=123 // pred_region
          %962 = dma.done [#allocation8], 16
        $region132: #{tpu_custom_call.1} parent=123 // pred_fallthru
          _
        // Predicated region
        $region133: #{tpu_custom_call.1} parent=123 // pred_check
          %p963 = pneg %p155
        $region134: #{tpu_custom_call.1} parent=123 // pred_check_branch
          %965 = sbr.rel (%p963) target = $region136
        $region135: #{tpu_custom_call.1} parent=123 // pred_region
          %966 = dma.done [#allocation8], 16
        $region136: #{tpu_custom_call.1} parent=123 // pred_fallthru
          _
        // Predicated region
        $region137: #{tpu_custom_call.1} parent=123 // pred_check
          %p967 = pneg %p218
        $region138: #{tpu_custom_call.1} parent=123 // pred_check_branch
          %969 = sbr.rel (%p967) target = $region140
        $region139: #{tpu_custom_call.1} parent=123 // pred_region
          %970 = dma.done [#allocation11], 320
        $region140: #{tpu_custom_call.1} parent=123 // pred_fallthru
          _
        // Predicated region
        $region141: #{tpu_custom_call.1} parent=123 // pred_check
          %p971 = pneg %p239
        $region142: #{tpu_custom_call.1} parent=123 // pred_check_branch
          %973 = sbr.rel (%p971) target = $region144
        $region143: #{tpu_custom_call.1} parent=123 // pred_region
          %974 = dma.done [#allocation11], 16
        $region144: #{tpu_custom_call.1} parent=123 // pred_fallthru
          _
        // Predicated region
        $region145: #{tpu_custom_call.1} parent=123 // pred_check
          %p975 = pneg %p260
        $region146: #{tpu_custom_call.1} parent=123 // pred_check_branch
          %977 = sbr.rel (%p975) target = $region148
        $region147: #{tpu_custom_call.1} parent=123 // pred_region
          %978 = dma.done [#allocation14], 128
        $region148: #{tpu_custom_call.1} parent=123 // pred_fallthru
          _
        // Predicated region
        $region149: #{tpu_custom_call.1} parent=123 // pred_check
          %p979 = pneg %p281
        $region150: #{tpu_custom_call.1} parent=123 // pred_check_branch
          %981 = sbr.rel (%p979) target = $region152
        $region151: #{tpu_custom_call.1} parent=123 // pred_region
          %982 = dma.done [#allocation14], 16
        $region152: #{tpu_custom_call.1} parent=123 // pred_fallthru
          _
        %s983 = sand.u32 %s55, 1
        %s984 = scalar_lea.sflag [#allocation17], %s983
        %s985 = sand.u32 %s320, 1
        %s986 = scalar_lea.vmem [#allocation16], %s985
        // Predicated region
        $region153: #{tpu_custom_call.1} parent=123 // pred_check
          %p987 = pneg %p333
        $region154: #{tpu_custom_call.1} parent=123 // pred_check_branch
          %989 = sbr.rel (%p987) target = $region156
        $region155: #{tpu_custom_call.1} parent=123 // pred_region
          %990 = dma.done %s984, 16
        $region156: #{tpu_custom_call.1} parent=123 // pred_fallthru
          _
        %s991 = sand.u32 %s55, 1
        %s992 = scalar_lea.sflag [#allocation17], %s991
        %s993 = sand.u32 %s346, 1
        %s994 = scalar_lea.vmem [#allocation18], %s993
        // Predicated region
        $region157: #{tpu_custom_call.1} parent=123 // pred_check
          %p995 = pneg %p359
        $region158: #{tpu_custom_call.1} parent=123 // pred_check_branch
          %997 = sbr.rel (%p995) target = $region160
        $region159: #{tpu_custom_call.1} parent=123 // pred_region
          %998 = dma.done %s992, 16
        $region160: #{tpu_custom_call.1} parent=123 // pred_fallthru
          _
        %s999 = sand.u32 %s55, 1
        %s1000 = scalar_lea.sflag [#allocation20], %s999
        %s1001 = sand.u32 %s372, 1
        %s1002 = smul.addr %s1001, 128
        %s1003 = scalar_lea.vmem [#allocation19], %s1002
        // Predicated region
        $region161: #{tpu_custom_call.1} parent=123 // pred_check
          %p1004 = pneg %p385
        $region162: #{tpu_custom_call.1} parent=123 // pred_check_branch
          %1006 = sbr.rel (%p1004) target = $region164
        $region163: #{tpu_custom_call.1} parent=123 // pred_region
          %1007 = dma.done %s1000, 2048
        $region164: #{tpu_custom_call.1} parent=123 // pred_fallthru
          _
        %s1008 = sand.u32 %s55, 1
        %s1009 = scalar_lea.sflag [#allocation20], %s1008
        %s1010 = sand.u32 %s398, 1
        %s1011 = smul.addr %s1010, 2
        %s1012 = scalar_lea.vmem [#allocation21], %s1011
        // Predicated region
        $region165: #{tpu_custom_call.1} parent=123 // pred_check
          %p1013 = pneg %p411
        $region166: #{tpu_custom_call.1} parent=123 // pred_check_branch
          %1015 = sbr.rel (%p1013) target = $region168
        $region167: #{tpu_custom_call.1} parent=123 // pred_region
          %1016 = dma.done %s1009, 32
        $region168: #{tpu_custom_call.1} parent=123 // pred_fallthru
          _
        %s1017 = sand.u32 %s55, 1
        %s1018 = scalar_lea.sflag [#allocation23], %s1017
        %s1019 = sand.u32 %s424, 1
        %s1020 = smul.addr %s1019, 128
        %s1021 = scalar_lea.vmem [#allocation22], %s1020
        // Predicated region
        $region169: #{tpu_custom_call.1} parent=123 // pred_check
          %p1022 = pneg %p437
        $region170: #{tpu_custom_call.1} parent=123 // pred_check_branch
          %1024 = sbr.rel (%p1022) target = $region172
        $region171: #{tpu_custom_call.1} parent=123 // pred_region
          %1025 = dma.done %s1018, 2048
        $region172: #{tpu_custom_call.1} parent=123 // pred_fallthru
          _
        %s1026 = sand.u32 %s55, 1
        %s1027 = scalar_lea.sflag [#allocation23], %s1026
        %s1028 = sand.u32 %s450, 1
        %s1029 = scalar_lea.vmem [#allocation24], %s1028
        // Predicated region
        $region173: #{tpu_custom_call.1} parent=123 // pred_check
          %p1030 = pneg %p463
        $region174: #{tpu_custom_call.1} parent=123 // pred_check_branch
          %1032 = sbr.rel (%p1030) target = $region176
        $region175: #{tpu_custom_call.1} parent=123 // pred_region
          %1033 = dma.done %s1027, 16
        $region176: #{tpu_custom_call.1} parent=123 // pred_fallthru
          _
        %s1034 = sand.u32 %s55, 1
        %s1035 = scalar_lea.sflag [#allocation26], %s1034
        %s1036 = sand.u32 %s476, 1
        %s1037 = scalar_lea.vmem [#allocation25], %s1036
        // Predicated region
        $region177: #{tpu_custom_call.1} parent=123 // pred_check
          %p1038 = pneg %p489
        $region178: #{tpu_custom_call.1} parent=123 // pred_check_branch
          %1040 = sbr.rel (%p1038) target = $region180
        $region179: #{tpu_custom_call.1} parent=123 // pred_region
          %1041 = dma.done %s1035, 16
        $region180: #{tpu_custom_call.1} parent=123 // pred_fallthru
          _
        %s1042 = sand.u32 %s55, 1
        %s1043 = scalar_lea.sflag [#allocation26], %s1042
        %s1044 = sand.u32 %s502, 1
        %s1045 = scalar_lea.vmem [#allocation27], %s1044
        // Predicated region
        $region181: #{tpu_custom_call.1} parent=123 // pred_check
          %p1046 = pneg %p515
        $region182: #{tpu_custom_call.1} parent=123 // pred_check_branch
          %1048 = sbr.rel (%p1046) target = $region184
        $region183: #{tpu_custom_call.1} parent=123 // pred_region
          %1049 = dma.done %s1043, 16
        $region184: #{tpu_custom_call.1} parent=123 // pred_fallthru
          _
        %p1050 = pneg %p71
        %p1051 = pneg %p68
        %p1052 = pneg %p92
        %p1053 = pneg %p89
        %p1054 = pneg %p113
        %p1055 = pneg %p110
        %p1056 = pneg %p134
        %p1057 = pneg %p131
        %p1058 = pneg %p155
        %p1059 = pneg %p152
        %p1060 = pneg %p176
        %p1061 = pneg %p173
        %p1062 = pneg %p197
        %p1063 = pneg %p194
        %p1064 = pneg %p218
        %p1065 = pneg %p215
        %p1066 = pneg %p239
        %p1067 = pneg %p236
        %p1068 = pneg %p260
        %p1069 = pneg %p257
        %p1070 = pneg %p281
        %p1071 = pneg %p278
        %p1072 = scmp.lt.s32.totalorder %s55, 3
        %s1073 = scalar_select %p1072, %s55, 3
        %s1074 = smul.addr %s1073, 16
        %s1075 = smul.addr %s1074, 4
        %s1076 = scalar_lea.vmem %s11, %s1075
        %p1077 = pneg %p307
        %p1078 = pneg %p304
        %s1079 = sand.u32 %s55, 1
        %s1080 = scalar_lea.sflag [#allocation17], %s1079
        %s1081 = sand.u32 %s320, 1
        %s1082 = scalar_lea.vmem [#allocation16], %s1081
        %p1083 = pneg %p333
        %p1084 = pneg %p330
        %s1085 = sand.u32 %s55, 1
        %s1086 = scalar_lea.sflag [#allocation17], %s1085
        %s1087 = sand.u32 %s346, 1
        %s1088 = scalar_lea.vmem [#allocation18], %s1087
        %p1089 = pneg %p359
        %p1090 = pneg %p356
        %s1091 = sand.u32 %s55, 1
        %s1092 = scalar_lea.sflag [#allocation20], %s1091
        %s1093 = sand.u32 %s372, 1
        %s1094 = smul.addr %s1093, 128
        %s1095 = scalar_lea.vmem [#allocation19], %s1094
        %p1096 = pneg %p385
        %p1097 = pneg %p382
        %s1098 = sand.u32 %s55, 1
        %s1099 = scalar_lea.sflag [#allocation20], %s1098
        %s1100 = sand.u32 %s398, 1
        %s1101 = smul.addr %s1100, 2
        %s1102 = scalar_lea.vmem [#allocation21], %s1101
        %p1103 = pneg %p411
        %p1104 = pneg %p408
        %s1105 = sand.u32 %s55, 1
        %s1106 = scalar_lea.sflag [#allocation23], %s1105
        %s1107 = sand.u32 %s424, 1
        %s1108 = smul.addr %s1107, 128
        %s1109 = scalar_lea.vmem [#allocation22], %s1108
        %p1110 = pneg %p437
        %p1111 = pneg %p434
        %s1112 = sand.u32 %s55, 1
        %s1113 = scalar_lea.sflag [#allocation23], %s1112
        %s1114 = sand.u32 %s450, 1
        %s1115 = scalar_lea.vmem [#allocation24], %s1114
        %p1116 = pneg %p463
        %p1117 = pneg %p460
        %s1118 = sand.u32 %s55, 1
        %s1119 = scalar_lea.sflag [#allocation26], %s1118
        %s1120 = sand.u32 %s476, 1
        %s1121 = scalar_lea.vmem [#allocation25], %s1120
        %p1122 = pneg %p489
        %p1123 = pneg %p486
        %s1124 = sand.u32 %s55, 1
        %s1125 = scalar_lea.sflag [#allocation26], %s1124
        %s1126 = sand.u32 %s502, 1
        %s1127 = scalar_lea.vmem [#allocation27], %s1126
        %p1128 = pneg %p515
        %p1129 = pneg %p512
        %p1130 = pneg %p536
        %p1131 = pneg %p533
        %p1132 = pneg %p557
        %p1133 = pneg %p554
        %p1134 = pneg %p578
        %p1135 = pneg %p575
        %p1136 = pneg %p599
        %p1137 = pneg %p596
        %p1138 = pneg %p620
        %p1139 = pneg %p617
        %p1140 = pneg %p641
        %p1141 = pneg %p638
        %p1142 = pneg %p662
        %p1143 = pneg %p659
        %p1144 = scmp.lt.s32.totalorder %s55, 3
        %s1145 = scalar_select %p1144, %s55, 3
        %s1146 = smul.addr %s1145, 16
        %s1147 = smul.addr %s1146, 4
        %s1148 = scalar_lea.vmem %s11, %s1147
        %p1150 = scmp.eq.s32.totalorder %s55, 0
        // Predicated region
        $region185: #{tpu_custom_call.1} parent=123 // pred_check
          %p1151 = pneg %p1150
        $region186: #{tpu_custom_call.1} parent=123 // pred_check_branch
          %1153 = sbr.rel (%p1151) target = $region188
        $region187: #{tpu_custom_call.1} parent=123 // pred_region
          %v1154 = vld [vmem:[#allocation5] sm:$0xf]
          %v1155 = vld [vmem:[#allocation5 + $0x4] sm:$0xf]
          %v1156 = vld [vmem:[#allocation10] sm:$0xf]
          %v1157 = vld [vmem:[#allocation10 + $0x4] sm:$0xf]
          %v1158 = vld [vmem:[#allocation10 + $0x8] sm:$0xf]
          %v1159 = vld [vmem:[#allocation10 + $0xc] sm:$0xf]
          %v1160 = vld [vmem:[#allocation10 + $0x10] sm:$0xf]
          %v1161 = vld [vmem:[#allocation12] sm:$0x1]
          %v1163 = vlaneseq
          %v1164 = vshrl.u32 %v1163, 7
          %v1165 = vsub.s32 0, %v1164
          %v1166 = vrot.slane %v1161, %v1165
          %v1170 = vunpack.c.l.b16 %v1154
          %v1171 = vunpack.c.l.b16 %v1155
          %v1172 = vpack.c.b16 %v1171, %v1170
          %v1178 = vunpack.c.l.b16 %v1156
          %v1179 = vunpack.c.l.b16 %v1157
          %v1180 = vunpack.c.l.b16 %v1158
          %v1181 = vunpack.c.l.b16 %v1159
          %v1182 = vunpack.c.l.b16 %v1160
          %v1183 = vpack.c.b16 %v1179, %v1178
          %v1184 = vpack.c.b16 %v1181, %v1180
          %v1185 = vpack.c.b16 %v1182, %v1182
          %vm1188 = vcmask 326656
          %v1190 = vsel %vm1188, %v1172, 0
          %vm1192 = vcmask 1043456
          %v1194 = vsel %vm1192, %v1185, 0
          %1196 = vmatprep.subr.bf16.mxu0 0
          %1197 = vmatpush1.bf16.msra.mxu0 %v1183
          %1198 = vmatprep.subr.bf16.mxu0 0
          %1199 = vmatpush1.bf16.msra.mxu0 %v1184
          %1200 = vmatprep.subr.bf16.mxu0 0
          %1201 = vmatpush1.bf16.msra.mxu0 %v1194
          %1202 = vmatprep.subr.bf16.mxu0 0
          %1203 = vmatpush1.bf16.msra.mxu0 0
          %1204 = vmatprep.subr.bf16.mxu0 0
          %1205 = vmatpush1.bf16.msra.mxu0 0
          %1206 = vmatprep.subr.bf16.mxu0 0
          %1207 = vmatpush1.bf16.msra.mxu0 0
          %1208 = vmatprep.subr.bf16.mxu0 0
          %1209 = vmatpush1.bf16.msra.mxu0 0
          %1210 = vmatprep.subr.bf16.mxu0 0
          %1211 = vmatpush1.bf16.msra.mxu0 0
          %1212 = vmatprep.subr.bf16.mxu0 0
          %1213 = vmatpush1.bf16.msra.mxu0 0
          %1214 = vmatprep.subr.bf16.mxu0 0
          %1215 = vmatpush1.bf16.msra.mxu0 0
          %1216 = vmatprep.subr.bf16.mxu0 0
          %1217 = vmatpush1.bf16.msra.mxu0 0
          %1218 = vmatprep.subr.bf16.mxu0 0
          %1219 = vmatpush1.bf16.msra.mxu0 0
          %1220 = vmatprep.subr.bf16.mxu0 0
          %1221 = vmatpush1.bf16.msra.mxu0 0
          %1222 = vmatprep.subr.bf16.mxu0 0
          %1223 = vmatpush1.bf16.msra.mxu0 0
          %1224 = vmatprep.subr.bf16.mxu0 0
          %1225 = vmatpush1.bf16.msra.mxu0 0
          %1226 = vmatprep.subr.bf16.mxu0 0
          %1227 = vmatpush1.bf16.msra.mxu0 0
          %1228 = vmatprep.mubr.bf16.mxu0 0
          %1229 = vmatmul.mubr.bf16.gmra.mrb[0].mxu0 %v1190
          %v1230 = vpop.f32.mrb[0].mxu0
          %v1231 = vadd.f32 %v1166, %v1230
          %v1232 = vpop.f32.mrb[0].mxu0
          %v1233 = vpop.f32.mrb[0].mxu0
          %v1234 = vadd.f32 %v1166, %v1233
          %v1235 = vpop.f32.mrb[0].mxu0
          %1236 = vdwg.mxu0
          %1237 = vst [vmem:[#allocation2] sm:$0xff] %v1231
          %1238 = vst [vmem:[#allocation2 + $0x8] sm:$0xff] %v1234
          %v1239 = vld [vmem:[%s1] sm:$0xf]
          %v1240 = vld [vmem:[%s1 + $0x4] sm:$0xf]
          %v1241 = vld [vmem:[%s1 + $0x8] sm:$0xf]
          %v1242 = vld [vmem:[%s1 + $0xc] sm:$0xf]
          %v1243 = vld [vmem:[#allocation13] sm:$0xf]
          %v1244 = vld [vmem:[#allocation13 + $0x4] sm:$0x1]
          %v1245 = vld [vmem:[#allocation15] sm:$0x1]
          %v1247 = vlaneseq
          %v1248 = vshrl.u32 %v1247, 7
          %v1249 = vsub.s32 0, %v1248
          %v1250 = vrot.slane %v1245, %v1249
          %v1256 = vunpack.c.l.b16 %v1239
          %v1257 = vunpack.c.l.b16 %v1240
          %v1258 = vunpack.c.l.b16 %v1241
          %v1259 = vunpack.c.l.b16 %v1242
          %v1260 = vpack.c.b16 %v1257, %v1256
          %v1261 = vpack.c.b16 %v1259, %v1258
          %v1264 = vunpack.c.l.b16 %v1243
          %v1265 = vunpack.c.l.b16 %v1244
          %v1266 = vpack.c.b16 %v1265, %v1264
          %vm1267 = vcmask 80896
          %v1269 = vsel %vm1267, %v1260, 0
          %v1272 = vsel %vm1267, %v1261, 0
          %vm1274 = vcmask 1044480
          %v1276 = vsel %vm1274, %v1266, 0
          %1278 = vmatprep.subr.bf16.mxu0 0
          %1279 = vmatpush1.bf16.msra.mxu0 %v1276
          %1280 = vmatprep.subr.bf16.mxu0 0
          %1281 = vmatpush1.bf16.msra.mxu0 0
          %1282 = vmatprep.subr.bf16.mxu0 0
          %1283 = vmatpush1.bf16.msra.mxu0 0
          %1284 = vmatprep.subr.bf16.mxu0 0
          %1285 = vmatpush1.bf16.msra.mxu0 0
          %1286 = vmatprep.subr.bf16.mxu0 0
          %1287 = vmatpush1.bf16.msra.mxu0 0
          %1288 = vmatprep.subr.bf16.mxu0 0
          %1289 = vmatpush1.bf16.msra.mxu0 0
          %1290 = vmatprep.subr.bf16.mxu0 0
          %1291 = vmatpush1.bf16.msra.mxu0 0
          %1292 = vmatprep.subr.bf16.mxu0 0
          %1293 = vmatpush1.bf16.msra.mxu0 0
          %1294 = vmatprep.subr.bf16.mxu0 0
          %1295 = vmatpush1.bf16.msra.mxu0 0
          %1296 = vmatprep.subr.bf16.mxu0 0
          %1297 = vmatpush1.bf16.msra.mxu0 0
          %1298 = vmatprep.subr.bf16.mxu0 0
          %1299 = vmatpush1.bf16.msra.mxu0 0
          %1300 = vmatprep.subr.bf16.mxu0 0
          %1301 = vmatpush1.bf16.msra.mxu0 0
          %1302 = vmatprep.subr.bf16.mxu0 0
          %1303 = vmatpush1.bf16.msra.mxu0 0
          %1304 = vmatprep.subr.bf16.mxu0 0
          %1305 = vmatpush1.bf16.msra.mxu0 0
          %1306 = vmatprep.subr.bf16.mxu0 0
          %1307 = vmatpush1.bf16.msra.mxu0 0
          %1308 = vmatprep.subr.bf16.mxu0 0
          %1309 = vmatpush1.bf16.msra.mxu0 0
          %1310 = vmatprep.mubr.bf16.mxu0 0
          %1311 = vmatmul.mubr.bf16.gmra.mrb[0].mxu0 %v1269
          %v1312 = vpop.f32.mrb[0].mxu0
          %v1313 = vadd.f32 %v1250, %v1312
          %v1314 = vpop.f32.mrb[0].mxu0
          %v1315 = vpop.f32.mrb[0].mxu0
          %v1316 = vadd.f32 %v1250, %v1315
          %v1317 = vpop.f32.mrb[0].mxu0
          %1318 = vmatprep.mubr.bf16.mxu0 0
          %1319 = vmatmul.mubr.bf16.gmra.mrb[0].mxu0 %v1272
          %v1320 = vpop.f32.mrb[0].mxu0
          %v1321 = vadd.f32 %v1250, %v1320
          %v1322 = vpop.f32.mrb[0].mxu0
          %v1323 = vpop.f32.mrb[0].mxu0
          %v1324 = vadd.f32 %v1250, %v1323
          %v1325 = vpop.f32.mrb[0].mxu0
          %1326 = vdwg.mxu0
          %1327 = vst [vmem:[#allocation3] sm:$0xff] %v1313
          %1328 = vst [vmem:[#allocation3 + $0x8] sm:$0xff] %v1316
          %1329 = vst [vmem:[#allocation3 + $0x10] sm:$0xff] %v1321
          %1330 = vst [vmem:[#allocation3 + $0x18] sm:$0xff] %v1324
        $region188: #{tpu_custom_call.1} parent=123 // pred_fallthru
          _
        %v1331 = vld [vmem:[#allocation2] sm:$0xff]
        %v1332 = vld [vmem:[#allocation2 + $0x8] sm:$0xff]
        %v1333 = vpack.c.bf16 %v1332, %v1331
        %v1334 = vld [vmem:[%s1148] sm:$0xf]
        %v1335 = vld [vmem:[%s1148 + $0x4] sm:$0xf]
        %v1336 = vld [vmem:[%s1148 + $0x8] sm:$0xf]
        %v1337 = vld [vmem:[%s1148 + $0xc] sm:$0xf]
        %v1338 = vld [vmem:[%s1148 + $0x10] sm:$0xf]
        %v1339 = vld [vmem:[%s1148 + $0x14] sm:$0xf]
        %v1340 = vld [vmem:[%s1148 + $0x18] sm:$0xf]
        %v1341 = vld [vmem:[%s1148 + $0x1c] sm:$0xf]
        %v1342 = vld [vmem:[%s1148 + $0x20] sm:$0xf]
        %v1343 = vld [vmem:[%s1148 + $0x24] sm:$0xf]
        %v1344 = vld [vmem:[%s1148 + $0x28] sm:$0xf]
        %v1345 = vld [vmem:[%s1148 + $0x2c] sm:$0xf]
        %v1346 = vld [vmem:[%s1148 + $0x30] sm:$0xf]
        %v1347 = vld [vmem:[%s1148 + $0x34] sm:$0xf]
        %v1348 = vld [vmem:[%s1148 + $0x38] sm:$0xf]
        %v1349 = vld [vmem:[%s1148 + $0x3c] sm:$0xf]
        %v1350 = vld [vmem:[%s986] sm:$0x1]
        %v1352 = vlaneseq
        %v1353 = vshrl.u32 %v1352, 7
        %v1354 = vsub.s32 0, %v1353
        %v1355 = vrot.slane %v1350, %v1354
        %v1373 = vunpack.c.l.b16 %v1334
        %v1374 = vunpack.c.l.b16 %v1335
        %v1375 = vunpack.c.l.b16 %v1336
        %v1376 = vunpack.c.l.b16 %v1337
        %v1377 = vunpack.c.l.b16 %v1338
        %v1378 = vunpack.c.l.b16 %v1339
        %v1379 = vunpack.c.l.b16 %v1340
        %v1380 = vunpack.c.l.b16 %v1341
        %v1381 = vunpack.c.l.b16 %v1342
        %v1382 = vunpack.c.l.b16 %v1343
        %v1383 = vunpack.c.l.b16 %v1344
        %v1384 = vunpack.c.l.b16 %v1345
        %v1385 = vunpack.c.l.b16 %v1346
        %v1386 = vunpack.c.l.b16 %v1347
        %v1387 = vunpack.c.l.b16 %v1348
        %v1388 = vunpack.c.l.b16 %v1349
        %v1389 = vpack.c.b16 %v1374, %v1373
        %v1390 = vpack.c.b16 %v1376, %v1375
        %v1391 = vpack.c.b16 %v1378, %v1377
        %v1392 = vpack.c.b16 %v1380, %v1379
        %v1393 = vpack.c.b16 %v1382, %v1381
        %v1394 = vpack.c.b16 %v1384, %v1383
        %v1395 = vpack.c.b16 %v1386, %v1385
        %v1396 = vpack.c.b16 %v1388, %v1387
        %1405 = vmatprep.subr.bf16.mxu0 0
        %1406 = vmatpush1.bf16.msra.mxu0 %v1389
        %1407 = vmatprep.subr.bf16.mxu0 0
        %1408 = vmatpush1.bf16.msra.mxu0 %v1390
        %1409 = vmatprep.subr.bf16.mxu0 0
        %1410 = vmatpush1.bf16.msra.mxu0 %v1391
        %1411 = vmatprep.subr.bf16.mxu0 0
        %1412 = vmatpush1.bf16.msra.mxu0 %v1392
        %1413 = vmatprep.subr.bf16.mxu0 0
        %1414 = vmatpush1.bf16.msra.mxu0 %v1393
        %1415 = vmatprep.subr.bf16.mxu0 0
        %1416 = vmatpush1.bf16.msra.mxu0 %v1394
        %1417 = vmatprep.subr.bf16.mxu0 0
        %1418 = vmatpush1.bf16.msra.mxu0 %v1395
        %1419 = vmatprep.subr.bf16.mxu0 0
        %1420 = vmatpush1.bf16.msra.mxu0 %v1396
        %1421 = vmatprep.subr.bf16.mxu0 0
        %1422 = vmatpush1.bf16.msra.mxu0 0
        %1423 = vmatprep.subr.bf16.mxu0 0
        %1424 = vmatpush1.bf16.msra.mxu0 0
        %1425 = vmatprep.subr.bf16.mxu0 0
        %1426 = vmatpush1.bf16.msra.mxu0 0
        %1427 = vmatprep.subr.bf16.mxu0 0
        %1428 = vmatpush1.bf16.msra.mxu0 0
        %1429 = vmatprep.subr.bf16.mxu0 0
        %1430 = vmatpush1.bf16.msra.mxu0 0
        %1431 = vmatprep.subr.bf16.mxu0 0
        %1432 = vmatpush1.bf16.msra.mxu0 0
        %1433 = vmatprep.subr.bf16.mxu0 0
        %1434 = vmatpush1.bf16.msra.mxu0 0
        %1435 = vmatprep.subr.bf16.mxu0 0
        %1436 = vmatpush1.bf16.msra.mxu0 0
        %1437 = vmatprep.mubr.bf16.mxu0 0
        %1438 = vmatmul.mubr.bf16.gmra.mrb[0].mxu0 %v1333
        %v1439 = vpop.f32.mrb[0].mxu0
        %v1440 = vadd.f32 %v1355, %v1439
        %v1441 = vpop.f32.mrb[0].mxu0
        %v1442 = vpop.f32.mrb[0].mxu0
        %v1443 = vadd.f32 %v1355, %v1442
        %v1444 = vpop.f32.mrb[0].mxu0
        %1445 = vdwg.mxu0
        %v1446 = vlaneseq
        %v1447 = vand.u32 %v1446, 127
        %v1448 = vld [vmem:[%s2] sm:$0xff]
        %v1449 = vld [vmem:[%s2 + $0x8] sm:$0xff]
        %v1450 = vld [vmem:[%s2 + $0x10] sm:$0xff]
        %v1451 = vld [vmem:[%s2 + $0x18] sm:$0xff]
        %1452 = vset.pattern.permute.xlu0 0
        %1453 = vperm.xlu0 %1452, %v1448
        %v1454 = vpop.permute.xlu0 %1453
        %1455 = vset.pattern.permute.xlu0 0
        %1456 = vperm.xlu0 %1455, %v1449
        %v1457 = vpop.permute.xlu0 %1456
        %1458 = vset.pattern.permute.xlu0 0
        %1459 = vperm.xlu0 %1458, %v1450
        %v1460 = vpop.permute.xlu0 %1459
        %1461 = vset.pattern.permute.xlu0 0
        %1462 = vperm.xlu0 %1461, %v1451
        %v1463 = vpop.permute.xlu0 %1462
        %vm1464 = vcmp.eq.s32.totalorder %v1447, %v1454
        %vm1465 = vcmp.eq.s32.totalorder %v1447, %v1457
        %vm1466 = vcmp.eq.s32.totalorder %v1447, %v1460
        %vm1467 = vcmp.eq.s32.totalorder %v1447, %v1463
        %v1468 = vsel %vm1464, 1, 0
        %v1469 = vsel %vm1465, 1, 0
        %v1470 = vsel %vm1466, 1, 0
        %v1471 = vsel %vm1467, 1, 0
        %v1472 = vcvt.s32.f32 %v1468
        %v1473 = vcvt.s32.f32 %v1469
        %v1474 = vcvt.s32.f32 %v1470
        %v1475 = vcvt.s32.f32 %v1471
        %v1476 = vpack.c.bf16 %v1473, %v1472
        %v1477 = vpack.c.bf16 %v1475, %v1474
        %v1478 = vpack.c.bf16 %v1443, %v1440
        %v1479 = vld [vmem:[%s5] sm:$0xff]
        %v1480 = vld [vmem:[%s5 + $0x8] sm:$0xff]
        %v1481 = vld [vmem:[%s5 + $0x10] sm:$0xff]
        %v1482 = vld [vmem:[%s5 + $0x18] sm:$0xff]
        %v1483 = vld [vmem:[#allocation3] sm:$0xff]
        %v1484 = vld [vmem:[#allocation3 + $0x8] sm:$0xff]
        %v1485 = vld [vmem:[#allocation3 + $0x10] sm:$0xff]
        %v1486 = vld [vmem:[#allocation3 + $0x18] sm:$0xff]
        %vm1487 = vcmask 130048
        %v1489 = vsel %vm1487, %v1476, 0
        %v1492 = vsel %vm1487, %v1477, 0
        %1494 = vmatprep.subr.bf16.mxu0 0
        %1495 = vmatpush1.bf16.msra.mxu0 %v1478
        %1496 = vmatprep.subr.bf16.mxu0 0
        %1497 = vmatpush1.bf16.msra.mxu0 0
        %1498 = vmatprep.subr.bf16.mxu0 0
        %1499 = vmatpush1.bf16.msra.mxu0 0
        %1500 = vmatprep.subr.bf16.mxu0 0
        %1501 = vmatpush1.bf16.msra.mxu0 0
        %1502 = vmatprep.subr.bf16.mxu0 0
        %1503 = vmatpush1.bf16.msra.mxu0 0
        %1504 = vmatprep.subr.bf16.mxu0 0
        %1505 = vmatpush1.bf16.msra.mxu0 0
        %1506 = vmatprep.subr.bf16.mxu0 0
        %1507 = vmatpush1.bf16.msra.mxu0 0
        %1508 = vmatprep.subr.bf16.mxu0 0
        %1509 = vmatpush1.bf16.msra.mxu0 0
        %1510 = vmatprep.subr.bf16.mxu0 0
        %1511 = vmatpush1.bf16.msra.mxu0 0
        %1512 = vmatprep.subr.bf16.mxu0 0
        %1513 = vmatpush1.bf16.msra.mxu0 0
        %1514 = vmatprep.subr.bf16.mxu0 0
        %1515 = vmatpush1.bf16.msra.mxu0 0
        %1516 = vmatprep.subr.bf16.mxu0 0
        %1517 = vmatpush1.bf16.msra.mxu0 0
        %1518 = vmatprep.subr.bf16.mxu0 0
        %1519 = vmatpush1.bf16.msra.mxu0 0
        %1520 = vmatprep.subr.bf16.mxu0 0
        %1521 = vmatpush1.bf16.msra.mxu0 0
        %1522 = vmatprep.subr.bf16.mxu0 0
        %1523 = vmatpush1.bf16.msra.mxu0 0
        %1524 = vmatprep.subr.bf16.mxu0 0
        %1525 = vmatpush1.bf16.msra.mxu0 0
        %1526 = vmatprep.mubr.bf16.mxu0 0
        %1527 = vmatmul.mubr.bf16.gmra.mrb[0].mxu0 %v1489
        %v1528 = vpop.f32.mrb[0].mxu0
        %v1529 = vadd.f32 %v1483, %v1528
        %v1530 = vpop.f32.mrb[0].mxu0
        %v1531 = vpop.f32.mrb[0].mxu0
        %v1532 = vadd.f32 %v1484, %v1531
        %v1533 = vpop.f32.mrb[0].mxu0
        %1534 = vmatprep.mubr.bf16.mxu0 0
        %1535 = vmatmul.mubr.bf16.gmra.mrb[0].mxu0 %v1492
        %v1536 = vpop.f32.mrb[0].mxu0
        %v1537 = vadd.f32 %v1485, %v1536
        %v1538 = vpop.f32.mrb[0].mxu0
        %v1539 = vpop.f32.mrb[0].mxu0
        %v1540 = vadd.f32 %v1486, %v1539
        %v1541 = vpop.f32.mrb[0].mxu0
        %1542 = vdwg.mxu0
        %v1543 = vmax.f32 %v1529, 0.0
        %v1544 = vmax.f32 %v1532, 0.0
        %v1545 = vmax.f32 %v1537, 0.0
        %v1546 = vmax.f32 %v1540, 0.0
        %1548 = vset.pattern.permute.xlu0 0
        %1549 = vperm.xlu0 %1548, %v1479
        %v1550 = vpop.permute.xlu0 %1549
        %1553 = vset.pattern.permute.xlu0 0
        %1554 = vperm.xlu0 %1553, %v1480
        %v1555 = vpop.permute.xlu0 %1554
        %1558 = vset.pattern.permute.xlu0 0
        %1559 = vperm.xlu0 %1558, %v1481
        %v1560 = vpop.permute.xlu0 %1559
        %1563 = vset.pattern.permute.xlu0 0
        %1564 = vperm.xlu0 %1563, %v1482
        %v1565 = vpop.permute.xlu0 %1564
        %v1567 = vmul.f32 %v1550, %v1543
        %v1568 = vmul.f32 %v1555, %v1544
        %v1569 = vmul.f32 %v1560, %v1545
        %v1570 = vmul.f32 %v1565, %v1546
        %v1571 = vlaneseq
        %v1572 = vshrl.u32 %v1571, 7
        %v1573 = vadd.s32 %v1572, 8
        %v1574 = vld [vmem:[#allocation7] sm:$0x1]
        %v1575 = vlaneseq
        %v1576 = vshrl.u32 %v1575, 7
        %v1577 = vsub.s32 0, %v1576
        %v1578 = vrot.slane %v1574, %v1577
        %vm1579 = vcmp.eq.s32.totalorder %v1572, %v1578
        %vm1580 = vcmp.eq.s32.totalorder %v1573, %v1578
        %v1581 = vsel %vm1579, 1, 0
        %v1582 = vsel %vm1580, 1, 0
        %v1583 = vcvt.s32.f32 %v1581
        %v1584 = vcvt.s32.f32 %v1582
        %v1585 = vpack.c.bf16 %v1584, %v1583
        %v1586 = vpack.c.bf16 %v1568, %v1567
        %v1587 = vpack.c.bf16 %v1570, %v1569
        %vm1588 = vcmask 261120
        %v1590 = vsel %vm1588, %v1585, 0
        %1592 = vmatprep.subr.bf16.mxu0 0
        %1593 = vmatpush1.bf16.msra.mxu0 %v1586
        %1594 = vmatprep.subr.bf16.mxu0 0
        %1595 = vmatpush1.bf16.msra.mxu0 %v1587
        %1596 = vmatprep.subr.bf16.mxu0 0
        %1597 = vmatpush1.bf16.msra.mxu0 0
        %1598 = vmatprep.subr.bf16.mxu0 0
        %1599 = vmatpush1.bf16.msra.mxu0 0
        %1600 = vmatprep.subr.bf16.mxu0 0
        %1601 = vmatpush1.bf16.msra.mxu0 0
        %1602 = vmatprep.subr.bf16.mxu0 0
        %1603 = vmatpush1.bf16.msra.mxu0 0
        %1604 = vmatprep.subr.bf16.mxu0 0
        %1605 = vmatpush1.bf16.msra.mxu0 0
        %1606 = vmatprep.subr.bf16.mxu0 0
        %1607 = vmatpush1.bf16.msra.mxu0 0
        %1608 = vmatprep.subr.bf16.mxu0 0
        %1609 = vmatpush1.bf16.msra.mxu0 0
        %1610 = vmatprep.subr.bf16.mxu0 0
        %1611 = vmatpush1.bf16.msra.mxu0 0
        %1612 = vmatprep.subr.bf16.mxu0 0
        %1613 = vmatpush1.bf16.msra.mxu0 0
        %1614 = vmatprep.subr.bf16.mxu0 0
        %1615 = vmatpush1.bf16.msra.mxu0 0
        %1616 = vmatprep.subr.bf16.mxu0 0
        %1617 = vmatpush1.bf16.msra.mxu0 0
        %1618 = vmatprep.subr.bf16.mxu0 0
        %1619 = vmatpush1.bf16.msra.mxu0 0
        %1620 = vmatprep.subr.bf16.mxu0 0
        %1621 = vmatpush1.bf16.msra.mxu0 0
        %1622 = vmatprep.subr.bf16.mxu0 0
        %1623 = vmatpush1.bf16.msra.mxu0 0
        %1624 = vmatprep.mubr.bf16.mxu0 0
        %1625 = vmatmul.mubr.bf16.gmra.mrb[0].mxu0 %v1590
        %v1626 = vpop.f32.mrb[0].mxu0
        %v1627 = vadd.f32 0.0, %v1626
        %v1628 = vpop.f32.mrb[0].mxu0
        %v1629 = vpop.f32.mrb[0].mxu0
        %v1630 = vadd.f32 0.0, %v1629
        %v1631 = vpop.f32.mrb[0].mxu0
        %1632 = vdwg.mxu0
        %v1633 = vpack.c.bf16 %v1630, %v1627
        %v1634 = vld [vmem:[%s1003] sm:$0xff]
        %v1635 = vld [vmem:[%s1003 + $0x8] sm:$0xff]
        %v1636 = vld [vmem:[%s1003 + $0x10] sm:$0xff]
        %v1637 = vld [vmem:[%s1003 + $0x18] sm:$0xff]
        %v1638 = vld [vmem:[%s1003 + $0x20] sm:$0xff]
        %v1639 = vld [vmem:[%s1003 + $0x28] sm:$0xff]
        %v1640 = vld [vmem:[%s1003 + $0x30] sm:$0xff]
        %v1641 = vld [vmem:[%s1003 + $0x38] sm:$0xff]
        %v1642 = vld [vmem:[%s1003 + $0x40] sm:$0xff]
        %v1643 = vld [vmem:[%s1003 + $0x48] sm:$0xff]
        %v1644 = vld [vmem:[%s1003 + $0x50] sm:$0xff]
        %v1645 = vld [vmem:[%s1003 + $0x58] sm:$0xff]
        %v1646 = vld [vmem:[%s1003 + $0x60] sm:$0xff]
        %v1647 = vld [vmem:[%s1003 + $0x68] sm:$0xff]
        %v1648 = vld [vmem:[%s1003 + $0x70] sm:$0xff]
        %v1649 = vld [vmem:[%s1003 + $0x78] sm:$0xff]
        %v1650 = vld [vmem:[%s1012] sm:$0x3]
        %v1652 = vlaneseq
        %v1653 = vshrl.u32 %v1652, 7
        %v1654 = vsub.s32 0, %v1653
        %v1655 = vrot.slane %v1650, %v1654
        %v1656 = vlaneseq
        %v1657 = vshrl.u32 %v1656, 7
        %v1658 = vsub.s32 1, %v1657
        %v1659 = vrot.slane %v1650, %v1658
        %v1678 = vunpack.c.l.b16 %v1634
        %v1679 = vunpack.c.h.b16 %v1634
        %v1680 = vunpack.c.l.b16 %v1635
        %v1681 = vunpack.c.h.b16 %v1635
        %v1682 = vunpack.c.l.b16 %v1636
        %v1683 = vunpack.c.h.b16 %v1636
        %v1684 = vunpack.c.l.b16 %v1637
        %v1685 = vunpack.c.h.b16 %v1637
        %v1686 = vunpack.c.l.b16 %v1638
        %v1687 = vunpack.c.h.b16 %v1638
        %v1688 = vunpack.c.l.b16 %v1639
        %v1689 = vunpack.c.h.b16 %v1639
        %v1690 = vunpack.c.l.b16 %v1640
        %v1691 = vunpack.c.h.b16 %v1640
        %v1692 = vunpack.c.l.b16 %v1641
        %v1693 = vunpack.c.h.b16 %v1641
        %v1694 = vunpack.c.l.b16 %v1642
        %v1695 = vunpack.c.h.b16 %v1642
        %v1696 = vunpack.c.l.b16 %v1643
        %v1697 = vunpack.c.h.b16 %v1643
        %v1698 = vunpack.c.l.b16 %v1644
        %v1699 = vunpack.c.h.b16 %v1644
        %v1700 = vunpack.c.l.b16 %v1645
        %v1701 = vunpack.c.h.b16 %v1645
        %v1702 = vunpack.c.l.b16 %v1646
        %v1703 = vunpack.c.h.b16 %v1646
        %v1704 = vunpack.c.l.b16 %v1647
        %v1705 = vunpack.c.h.b16 %v1647
        %v1706 = vunpack.c.l.b16 %v1648
        %v1707 = vunpack.c.h.b16 %v1648
        %v1708 = vunpack.c.l.b16 %v1649
        %v1709 = vunpack.c.h.b16 %v1649
        %v1710 = vpack.c.b16 %v1680, %v1678
        %v1711 = vpack.c.b16 %v1681, %v1679
        %v1712 = vpack.c.b16 %v1684, %v1682
        %v1713 = vpack.c.b16 %v1685, %v1683
        %v1714 = vpack.c.b16 %v1688, %v1686
        %v1715 = vpack.c.b16 %v1689, %v1687
        %v1716 = vpack.c.b16 %v1692, %v1690
        %v1717 = vpack.c.b16 %v1693, %v1691
        %v1718 = vpack.c.b16 %v1696, %v1694
        %v1719 = vpack.c.b16 %v1697, %v1695
        %v1720 = vpack.c.b16 %v1700, %v1698
        %v1721 = vpack.c.b16 %v1701, %v1699
        %v1722 = vpack.c.b16 %v1704, %v1702
        %v1723 = vpack.c.b16 %v1705, %v1703
        %v1724 = vpack.c.b16 %v1708, %v1706
        %v1725 = vpack.c.b16 %v1709, %v1707
        %1742 = vmatprep.subr.bf16.mxu0 %v1711
        %1743 = vmatpush1.bf16.msra.mxu0 %v1710
        %1744 = vmatprep.subr.bf16.mxu0 %v1713
        %1745 = vmatpush1.bf16.msra.mxu0 %v1712
        %1746 = vmatprep.subr.bf16.mxu0 %v1715
        %1747 = vmatpush1.bf16.msra.mxu0 %v1714
        %1748 = vmatprep.subr.bf16.mxu0 %v1717
        %1749 = vmatpush1.bf16.msra.mxu0 %v1716
        %1750 = vmatprep.subr.bf16.mxu0 %v1719
        %1751 = vmatpush1.bf16.msra.mxu0 %v1718
        %1752 = vmatprep.subr.bf16.mxu0 %v1721
        %1753 = vmatpush1.bf16.msra.mxu0 %v1720
        %1754 = vmatprep.subr.bf16.mxu0 %v1723
        %1755 = vmatpush1.bf16.msra.mxu0 %v1722
        %1756 = vmatprep.subr.bf16.mxu0 %v1725
        %1757 = vmatpush1.bf16.msra.mxu0 %v1724
        %1758 = vmatprep.subr.bf16.mxu0 0
        %1759 = vmatpush1.bf16.msra.mxu0 0
        %1760 = vmatprep.subr.bf16.mxu0 0
        %1761 = vmatpush1.bf16.msra.mxu0 0
        %1762 = vmatprep.subr.bf16.mxu0 0
        %1763 = vmatpush1.bf16.msra.mxu0 0
        %1764 = vmatprep.subr.bf16.mxu0 0
        %1765 = vmatpush1.bf16.msra.mxu0 0
        %1766 = vmatprep.subr.bf16.mxu0 0
        %1767 = vmatpush1.bf16.msra.mxu0 0
        %1768 = vmatprep.subr.bf16.mxu0 0
        %1769 = vmatpush1.bf16.msra.mxu0 0
        %1770 = vmatprep.subr.bf16.mxu0 0
        %1771 = vmatpush1.bf16.msra.mxu0 0
        %1772 = vmatprep.subr.bf16.mxu0 0
        %1773 = vmatpush1.bf16.msra.mxu0 0
        %1774 = vmatprep.mubr.bf16.mxu0 0
        %1775 = vmatmul.mubr.bf16.gmra.mrb[0].mxu0 %v1633
        %v1776 = vpop.f32.mrb[0].mxu0
        %v1777 = vadd.f32 %v1655, %v1776
        %v1778 = vpop.f32.mrb[0].mxu0
        %v1779 = vadd.f32 %v1659, %v1778
        %v1780 = vpop.f32.mrb[0].mxu0
        %v1781 = vadd.f32 %v1655, %v1780
        %v1782 = vpop.f32.mrb[0].mxu0
        %v1783 = vadd.f32 %v1659, %v1782
        %1784 = vdwg.mxu0
        %v1785 = vmax.f32 %v1777, 0.0
        %v1786 = vmax.f32 %v1779, 0.0
        %v1787 = vmax.f32 %v1781, 0.0
        %v1788 = vmax.f32 %v1783, 0.0
        %v1789 = vpack.c.bf16 %v1787, %v1785
        %v1790 = vpack.c.bf16 %v1788, %v1786
        %v1791 = vld [vmem:[%s1021] sm:$0xf]
        %v1792 = vld [vmem:[%s1021 + $0x4] sm:$0xf]
        %v1793 = vld [vmem:[%s1021 + $0x8] sm:$0xf]
        %v1794 = vld [vmem:[%s1021 + $0xc] sm:$0xf]
        %v1795 = vld [vmem:[%s1021 + $0x10] sm:$0xf]
        %v1796 = vld [vmem:[%s1021 + $0x14] sm:$0xf]
        %v1797 = vld [vmem:[%s1021 + $0x18] sm:$0xf]
        %v1798 = vld [vmem:[%s1021 + $0x1c] sm:$0xf]
        %v1799 = vld [vmem:[%s1021 + $0x20] sm:$0xf]
        %v1800 = vld [vmem:[%s1021 + $0x24] sm:$0xf]
        %v1801 = vld [vmem:[%s1021 + $0x28] sm:$0xf]
        %v1802 = vld [vmem:[%s1021 + $0x2c] sm:$0xf]
        %v1803 = vld [vmem:[%s1021 + $0x30] sm:$0xf]
        %v1804 = vld [vmem:[%s1021 + $0x34] sm:$0xf]
        %v1805 = vld [vmem:[%s1021 + $0x38] sm:$0xf]
        %v1806 = vld [vmem:[%s1021 + $0x3c] sm:$0xf]
        %v1807 = vld [vmem:[%s1021 + $0x40] sm:$0xf]
        %v1808 = vld [vmem:[%s1021 + $0x44] sm:$0xf]
        %v1809 = vld [vmem:[%s1021 + $0x48] sm:$0xf]
        %v1810 = vld [vmem:[%s1021 + $0x4c] sm:$0xf]
        %v1811 = vld [vmem:[%s1021 + $0x50] sm:$0xf]
        %v1812 = vld [vmem:[%s1021 + $0x54] sm:$0xf]
        %v1813 = vld [vmem:[%s1021 + $0x58] sm:$0xf]
        %v1814 = vld [vmem:[%s1021 + $0x5c] sm:$0xf]
        %v1815 = vld [vmem:[%s1021 + $0x60] sm:$0xf]
        %v1816 = vld [vmem:[%s1021 + $0x64] sm:$0xf]
        %v1817 = vld [vmem:[%s1021 + $0x68] sm:$0xf]
        %v1818 = vld [vmem:[%s1021 + $0x6c] sm:$0xf]
        %v1819 = vld [vmem:[%s1021 + $0x70] sm:$0xf]
        %v1820 = vld [vmem:[%s1021 + $0x74] sm:$0xf]
        %v1821 = vld [vmem:[%s1021 + $0x78] sm:$0xf]
        %v1822 = vld [vmem:[%s1021 + $0x7c] sm:$0xf]
        %v1823 = vld [vmem:[%s1029] sm:$0x1]
        %v1825 = vlaneseq
        %v1826 = vshrl.u32 %v1825, 7
        %v1827 = vsub.s32 0, %v1826
        %v1828 = vrot.slane %v1823, %v1827
        %v1862 = vunpack.c.l.b16 %v1791
        %v1863 = vunpack.c.l.b16 %v1792
        %v1864 = vunpack.c.l.b16 %v1793
        %v1865 = vunpack.c.l.b16 %v1794
        %v1866 = vunpack.c.l.b16 %v1795
        %v1867 = vunpack.c.l.b16 %v1796
        %v1868 = vunpack.c.l.b16 %v1797
        %v1869 = vunpack.c.l.b16 %v1798
        %v1870 = vunpack.c.l.b16 %v1799
        %v1871 = vunpack.c.l.b16 %v1800
        %v1872 = vunpack.c.l.b16 %v1801
        %v1873 = vunpack.c.l.b16 %v1802
        %v1874 = vunpack.c.l.b16 %v1803
        %v1875 = vunpack.c.l.b16 %v1804
        %v1876 = vunpack.c.l.b16 %v1805
        %v1877 = vunpack.c.l.b16 %v1806
        %v1878 = vunpack.c.l.b16 %v1807
        %v1879 = vunpack.c.l.b16 %v1808
        %v1880 = vunpack.c.l.b16 %v1809
        %v1881 = vunpack.c.l.b16 %v1810
        %v1882 = vunpack.c.l.b16 %v1811
        %v1883 = vunpack.c.l.b16 %v1812
        %v1884 = vunpack.c.l.b16 %v1813
        %v1885 = vunpack.c.l.b16 %v1814
        %v1886 = vunpack.c.l.b16 %v1815
        %v1887 = vunpack.c.l.b16 %v1816
        %v1888 = vunpack.c.l.b16 %v1817
        %v1889 = vunpack.c.l.b16 %v1818
        %v1890 = vunpack.c.l.b16 %v1819
        %v1891 = vunpack.c.l.b16 %v1820
        %v1892 = vunpack.c.l.b16 %v1821
        %v1893 = vunpack.c.l.b16 %v1822
        %v1894 = vpack.c.b16 %v1863, %v1862
        %v1895 = vpack.c.b16 %v1865, %v1864
        %v1896 = vpack.c.b16 %v1867, %v1866
        %v1897 = vpack.c.b16 %v1869, %v1868
        %v1898 = vpack.c.b16 %v1871, %v1870
        %v1899 = vpack.c.b16 %v1873, %v1872
        %v1900 = vpack.c.b16 %v1875, %v1874
        %v1901 = vpack.c.b16 %v1877, %v1876
        %v1902 = vpack.c.b16 %v1879, %v1878
        %v1903 = vpack.c.b16 %v1881, %v1880
        %v1904 = vpack.c.b16 %v1883, %v1882
        %v1905 = vpack.c.b16 %v1885, %v1884
        %v1906 = vpack.c.b16 %v1887, %v1886
        %v1907 = vpack.c.b16 %v1889, %v1888
        %v1908 = vpack.c.b16 %v1891, %v1890
        %v1909 = vpack.c.b16 %v1893, %v1892
        %1926 = vmatprep.subr.bf16.mxu0 0
        %1927 = vmatpush1.bf16.msra.mxu0 %v1894
        %1928 = vmatprep.subr.bf16.mxu0 0
        %1929 = vmatpush1.bf16.msra.mxu0 %v1895
        %1930 = vmatprep.subr.bf16.mxu0 0
        %1931 = vmatpush1.bf16.msra.mxu0 %v1896
        %1932 = vmatprep.subr.bf16.mxu0 0
        %1933 = vmatpush1.bf16.msra.mxu0 %v1897
        %1934 = vmatprep.subr.bf16.mxu0 0
        %1935 = vmatpush1.bf16.msra.mxu0 %v1898
        %1936 = vmatprep.subr.bf16.mxu0 0
        %1937 = vmatpush1.bf16.msra.mxu0 %v1899
        %1938 = vmatprep.subr.bf16.mxu0 0
        %1939 = vmatpush1.bf16.msra.mxu0 %v1900
        %1940 = vmatprep.subr.bf16.mxu0 0
        %1941 = vmatpush1.bf16.msra.mxu0 %v1901
        %1942 = vmatprep.subr.bf16.mxu0 0
        %1943 = vmatpush1.bf16.msra.mxu0 %v1902
        %1944 = vmatprep.subr.bf16.mxu0 0
        %1945 = vmatpush1.bf16.msra.mxu0 %v1903
        %1946 = vmatprep.subr.bf16.mxu0 0
        %1947 = vmatpush1.bf16.msra.mxu0 %v1904
        %1948 = vmatprep.subr.bf16.mxu0 0
        %1949 = vmatpush1.bf16.msra.mxu0 %v1905
        %1950 = vmatprep.subr.bf16.mxu0 0
        %1951 = vmatpush1.bf16.msra.mxu0 %v1906
        %1952 = vmatprep.subr.bf16.mxu0 0
        %1953 = vmatpush1.bf16.msra.mxu0 %v1907
        %1954 = vmatprep.subr.bf16.mxu0 0
        %1955 = vmatpush1.bf16.msra.mxu0 %v1908
        %1956 = vmatprep.subr.bf16.mxu0 0
        %1957 = vmatpush1.bf16.msra.mxu0 %v1909
        %1958 = vmatprep.mubr.bf16.mxu0 %v1790
        %1959 = vmatmul.mubr.bf16.gmra.mrb[0].mxu0 %v1789
        %v1960 = vpop.f32.mrb[0].mxu0
        %v1961 = vadd.f32 %v1828, %v1960
        %v1962 = vpop.f32.mrb[0].mxu0
        %v1963 = vpop.f32.mrb[0].mxu0
        %v1964 = vadd.f32 %v1828, %v1963
        %v1965 = vpop.f32.mrb[0].mxu0
        %1966 = vdwg.mxu0
        %v1967 = vld [vmem:[%s994] sm:$0x1]
        %v1969 = vlaneseq
        %v1970 = vshrl.u32 %v1969, 7
        %v1971 = vsub.s32 0, %v1970
        %v1972 = vrot.slane %v1967, %v1971
        %v1974 = vadd.f32 %v1440, %v1972
        %v1975 = vadd.f32 %v1443, %v1972
        %v1976 = vmax.f32 %v1974, 0.0
        %v1977 = vmax.f32 %v1975, 0.0
        %v1978 = vld [vmem:[%s6] sm:$0xff]
        %v1979 = vld [vmem:[%s6 + $0x8] sm:$0xff]
        %1981 = vset.pattern.permute.xlu0 0
        %1982 = vperm.xlu0 %1981, %v1978
        %v1983 = vpop.permute.xlu0 %1982
        %1986 = vset.pattern.permute.xlu0 0
        %1987 = vperm.xlu0 %1986, %v1979
        %v1988 = vpop.permute.xlu0 %1987
        %v1990 = vmul.f32 %v1976, %v1983
        %v1991 = vmul.f32 %v1977, %v1988
        %v1992 = vadd.f32 %v1961, %v1990
        %v1993 = vadd.f32 %v1964, %v1991
        %v1994 = vadd.f32 %v1331, %v1992
        %v1995 = vadd.f32 %v1332, %v1993
        %v1996 = vld [vmem:[%s1037] sm:$0x1]
        %v1998 = vlaneseq
        %v1999 = vshrl.u32 %v1998, 7
        %v2000 = vsub.s32 0, %v1999
        %v2001 = vrot.slane %v1996, %v2000
        %v2003 = vmul.f32 %v1994, %v2001
        %v2004 = vmul.f32 %v1995, %v2001
        %v2005 = vld [vmem:[%s1045] sm:$0x1]
        %v2007 = vlaneseq
        %v2008 = vshrl.u32 %v2007, 7
        %v2009 = vsub.s32 0, %v2008
        %v2010 = vrot.slane %v2005, %v2009
        %v2012 = vadd.f32 %v2003, %v2010
        %v2013 = vadd.f32 %v2004, %v2010
        %2014 = vst [vmem:[#allocation2] sm:$0xff] %v2012
        %2015 = vst [vmem:[#allocation2 + $0x8] sm:$0xff] %v2013
        %p2016 = scmp.lt.s32.totalorder %s55, 3
        // Predicated region
        $region189: #{tpu_custom_call.1} parent=123 // pred_check
          %p2017 = pneg %p2016
        $region190: #{tpu_custom_call.1} parent=123 // pred_check_branch
          %2019 = sbr.rel (%p2017) target = $region192
        $region191: #{tpu_custom_call.1} parent=123 // pred_region
          %v2020 = vld [vmem:[#allocation2] sm:$0xff]
          %v2021 = vld [vmem:[#allocation2 + $0x8] sm:$0xff]
          %v2022 = vmax.f32 %v2020, 0.0
          %v2023 = vmax.f32 %v2021, 0.0
          %2024 = vst [vmem:[#allocation2] sm:$0xff] %v2022
          %2025 = vst [vmem:[#allocation2 + $0x8] sm:$0xff] %v2023
        $region192: #{tpu_custom_call.1} parent=123 // pred_fallthru
          _
        %p2026 = scmp.eq.s32.totalorder %s55, 3
        // Predicated region
        $region193: #{tpu_custom_call.1} parent=123 // pred_check
          %p2027 = pneg %p2026
        $region194: #{tpu_custom_call.1} parent=123 // pred_check_branch
          %2029 = sbr.rel (%p2027) target = $region196
        $region195: #{tpu_custom_call.1} parent=123 // pred_region
          %v2030 = vld [vmem:[#allocation9] sm:$0x1]
          %v2031 = vlaneseq
          %v2032 = vshrl.u32 %v2031, 7
          %v2033 = vsub.s32 0, %v2032
          %v2034 = vrot.slane %v2030, %v2033
          %vm2035 = vcmp.eq.s32.totalorder %v1572, %v2034
          %v2036 = vsel %vm2035, 1, 0
          %v2037 = vcvt.s32.f32 %v2036
          %v2038 = vpack.c.bf16 %v2037, %v2037
          %v2039 = vld [vmem:[#allocation2] sm:$0xff]
          %v2040 = vld [vmem:[#allocation2 + $0x8] sm:$0xff]
          %v2041 = vpack.c.bf16 %v2040, %v2039
          %v2043 = vsel %vm1487, %v2038, 0
          %2045 = vmatprep.subr.bf16.mxu0 0
          %2046 = vmatpush1.bf16.msra.mxu0 %v2041
          %2047 = vmatprep.subr.bf16.mxu0 0
          %2048 = vmatpush1.bf16.msra.mxu0 0
          %2049 = vmatprep.subr.bf16.mxu0 0
          %2050 = vmatpush1.bf16.msra.mxu0 0
          %2051 = vmatprep.subr.bf16.mxu0 0
          %2052 = vmatpush1.bf16.msra.mxu0 0
          %2053 = vmatprep.subr.bf16.mxu0 0
          %2054 = vmatpush1.bf16.msra.mxu0 0
          %2055 = vmatprep.subr.bf16.mxu0 0
          %2056 = vmatpush1.bf16.msra.mxu0 0
          %2057 = vmatprep.subr.bf16.mxu0 0
          %2058 = vmatpush1.bf16.msra.mxu0 0
          %2059 = vmatprep.subr.bf16.mxu0 0
          %2060 = vmatpush1.bf16.msra.mxu0 0
          %2061 = vmatprep.subr.bf16.mxu0 0
          %2062 = vmatpush1.bf16.msra.mxu0 0
          %2063 = vmatprep.subr.bf16.mxu0 0
          %2064 = vmatpush1.bf16.msra.mxu0 0
          %2065 = vmatprep.subr.bf16.mxu0 0
          %2066 = vmatpush1.bf16.msra.mxu0 0
          %2067 = vmatprep.subr.bf16.mxu0 0
          %2068 = vmatpush1.bf16.msra.mxu0 0
          %2069 = vmatprep.subr.bf16.mxu0 0
          %2070 = vmatpush1.bf16.msra.mxu0 0
          %2071 = vmatprep.subr.bf16.mxu0 0
          %2072 = vmatpush1.bf16.msra.mxu0 0
          %2073 = vmatprep.subr.bf16.mxu0 0
          %2074 = vmatpush1.bf16.msra.mxu0 0
          %2075 = vmatprep.subr.bf16.mxu0 0
          %2076 = vmatpush1.bf16.msra.mxu0 0
          %2077 = vmatprep.mubr.bf16.mxu0 0
          %2078 = vmatmul.mubr.bf16.gmra.mrb[0].mxu0 %v2043
          %v2079 = vpop.f32.mrb[0].mxu0
          %v2080 = vadd.f32 0.0, %v2079
          %v2081 = vpop.f32.mrb[0].mxu0
          %v2082 = vpop.f32.mrb[0].mxu0
          %v2083 = vpop.f32.mrb[0].mxu0
          %2084 = vdwg.mxu0
          %v2085 = vpack.c.bf16 %v2080, %v2080
          %v2086 = vld [vmem:[%s20] sm:$0xf]
          %v2087 = vld [vmem:[%s20 + $0x4] sm:$0xf]
          %v2088 = vld [vmem:[%s20 + $0x8] sm:$0xf]
          %v2089 = vld [vmem:[%s20 + $0xc] sm:$0xf]
          %v2090 = vld [vmem:[%s20 + $0x10] sm:$0xf]
          %v2091 = vld [vmem:[%s20 + $0x14] sm:$0xf]
          %v2092 = vld [vmem:[%s20 + $0x18] sm:$0xf]
          %v2093 = vld [vmem:[%s20 + $0x1c] sm:$0xf]
          %v2094 = vld [vmem:[%s20 + $0x20] sm:$0xf]
          %v2095 = vld [vmem:[%s20 + $0x24] sm:$0xf]
          %v2096 = vld [vmem:[%s20 + $0x28] sm:$0xf]
          %v2097 = vld [vmem:[%s20 + $0x2c] sm:$0xf]
          %v2098 = vld [vmem:[%s20 + $0x30] sm:$0xf]
          %v2099 = vld [vmem:[%s20 + $0x34] sm:$0xf]
          %v2100 = vld [vmem:[%s20 + $0x38] sm:$0xf]
          %v2101 = vld [vmem:[%s20 + $0x3c] sm:$0xf]
          %v2102 = vld [vmem:[%s21] sm:$0x1]
          %v2104 = vlaneseq
          %v2105 = vshrl.u32 %v2104, 7
          %v2106 = vsub.s32 0, %v2105
          %v2107 = vrot.slane %v2102, %v2106
          %v2125 = vunpack.c.l.b16 %v2086
          %v2126 = vunpack.c.l.b16 %v2087
          %v2127 = vunpack.c.l.b16 %v2088
          %v2128 = vunpack.c.l.b16 %v2089
          %v2129 = vunpack.c.l.b16 %v2090
          %v2130 = vunpack.c.l.b16 %v2091
          %v2131 = vunpack.c.l.b16 %v2092
          %v2132 = vunpack.c.l.b16 %v2093
          %v2133 = vunpack.c.l.b16 %v2094
          %v2134 = vunpack.c.l.b16 %v2095
          %v2135 = vunpack.c.l.b16 %v2096
          %v2136 = vunpack.c.l.b16 %v2097
          %v2137 = vunpack.c.l.b16 %v2098
          %v2138 = vunpack.c.l.b16 %v2099
          %v2139 = vunpack.c.l.b16 %v2100
          %v2140 = vunpack.c.l.b16 %v2101
          %v2141 = vpack.c.b16 %v2126, %v2125
          %v2142 = vpack.c.b16 %v2128, %v2127
          %v2143 = vpack.c.b16 %v2130, %v2129
          %v2144 = vpack.c.b16 %v2132, %v2131
          %v2145 = vpack.c.b16 %v2134, %v2133
          %v2146 = vpack.c.b16 %v2136, %v2135
          %v2147 = vpack.c.b16 %v2138, %v2137
          %v2148 = vpack.c.b16 %v2140, %v2139
          %2157 = vmatprep.subr.bf16.mxu0 0
          %2158 = vmatpush1.bf16.msra.mxu0 %v2141
          %2159 = vmatprep.subr.bf16.mxu0 0
          %2160 = vmatpush1.bf16.msra.mxu0 %v2142
          %2161 = vmatprep.subr.bf16.mxu0 0
          %2162 = vmatpush1.bf16.msra.mxu0 %v2143
          %2163 = vmatprep.subr.bf16.mxu0 0
          %2164 = vmatpush1.bf16.msra.mxu0 %v2144
          %2165 = vmatprep.subr.bf16.mxu0 0
          %2166 = vmatpush1.bf16.msra.mxu0 %v2145
          %2167 = vmatprep.subr.bf16.mxu0 0
          %2168 = vmatpush1.bf16.msra.mxu0 %v2146
          %2169 = vmatprep.subr.bf16.mxu0 0
          %2170 = vmatpush1.bf16.msra.mxu0 %v2147
          %2171 = vmatprep.subr.bf16.mxu0 0
          %2172 = vmatpush1.bf16.msra.mxu0 %v2148
          %2173 = vmatprep.subr.bf16.mxu0 0
          %2174 = vmatpush1.bf16.msra.mxu0 0
          %2175 = vmatprep.subr.bf16.mxu0 0
          %2176 = vmatpush1.bf16.msra.mxu0 0
          %2177 = vmatprep.subr.bf16.mxu0 0
          %2178 = vmatpush1.bf16.msra.mxu0 0
          %2179 = vmatprep.subr.bf16.mxu0 0
          %2180 = vmatpush1.bf16.msra.mxu0 0
          %2181 = vmatprep.subr.bf16.mxu0 0
          %2182 = vmatpush1.bf16.msra.mxu0 0
          %2183 = vmatprep.subr.bf16.mxu0 0
          %2184 = vmatpush1.bf16.msra.mxu0 0
          %2185 = vmatprep.subr.bf16.mxu0 0
          %2186 = vmatpush1.bf16.msra.mxu0 0
          %2187 = vmatprep.subr.bf16.mxu0 0
          %2188 = vmatpush1.bf16.msra.mxu0 0
          %2189 = vmatprep.mubr.bf16.mxu0 0
          %2190 = vmatmul.mubr.bf16.gmra.mrb[0].mxu0 %v2085
          %v2191 = vpop.f32.mrb[0].mxu0
          %v2192 = vadd.f32 %v2107, %v2191
          %v2193 = vpop.f32.mrb[0].mxu0
          %v2194 = vpop.f32.mrb[0].mxu0
          %v2195 = vpop.f32.mrb[0].mxu0
          %2196 = vdwg.mxu0
          %v2197 = vmax.f32 %v2192, 0.0
          %v2198 = vpack.c.bf16 %v2197, %v2197
          %v2199 = vld [vmem:[%s22] sm:$0xf]
          %v2200 = vld [vmem:[%s22 + $0x4] sm:$0xf]
          %v2201 = vld [vmem:[%s22 + $0x8] sm:$0xf]
          %v2202 = vld [vmem:[%s22 + $0xc] sm:$0xf]
          %v2203 = vld [vmem:[%s22 + $0x10] sm:$0xf]
          %v2204 = vld [vmem:[%s22 + $0x14] sm:$0xf]
          %v2205 = vld [vmem:[%s22 + $0x18] sm:$0xf]
          %v2206 = vld [vmem:[%s22 + $0x1c] sm:$0xf]
          %v2207 = vld [vmem:[%s23] sm:$0x1]
          %v2209 = vlaneseq
          %v2210 = vshrl.u32 %v2209, 7
          %v2211 = vsub.s32 0, %v2210
          %v2212 = vrot.slane %v2207, %v2211
          %v2222 = vunpack.c.l.b16 %v2199
          %v2223 = vunpack.c.l.b16 %v2200
          %v2224 = vunpack.c.l.b16 %v2201
          %v2225 = vunpack.c.l.b16 %v2202
          %v2226 = vunpack.c.l.b16 %v2203
          %v2227 = vunpack.c.l.b16 %v2204
          %v2228 = vunpack.c.l.b16 %v2205
          %v2229 = vunpack.c.l.b16 %v2206
          %v2230 = vpack.c.b16 %v2223, %v2222
          %v2231 = vpack.c.b16 %v2225, %v2224
          %v2232 = vpack.c.b16 %v2227, %v2226
          %v2233 = vpack.c.b16 %v2229, %v2228
          %vm2238 = vcmask 523264
          %v2240 = vsel %vm2238, %v2198, 0
          %2242 = vmatprep.subr.bf16.mxu0 0
          %2243 = vmatpush1.bf16.msra.mxu0 %v2230
          %2244 = vmatprep.subr.bf16.mxu0 0
          %2245 = vmatpush1.bf16.msra.mxu0 %v2231
          %2246 = vmatprep.subr.bf16.mxu0 0
          %2247 = vmatpush1.bf16.msra.mxu0 %v2232
          %2248 = vmatprep.subr.bf16.mxu0 0
          %2249 = vmatpush1.bf16.msra.mxu0 %v2233
          %2250 = vmatprep.subr.bf16.mxu0 0
          %2251 = vmatpush1.bf16.msra.mxu0 0
          %2252 = vmatprep.subr.bf16.mxu0 0
          %2253 = vmatpush1.bf16.msra.mxu0 0
          %2254 = vmatprep.subr.bf16.mxu0 0
          %2255 = vmatpush1.bf16.msra.mxu0 0
          %2256 = vmatprep.subr.bf16.mxu0 0
          %2257 = vmatpush1.bf16.msra.mxu0 0
          %2258 = vmatprep.subr.bf16.mxu0 0
          %2259 = vmatpush1.bf16.msra.mxu0 0
          %2260 = vmatprep.subr.bf16.mxu0 0
          %2261 = vmatpush1.bf16.msra.mxu0 0
          %2262 = vmatprep.subr.bf16.mxu0 0
          %2263 = vmatpush1.bf16.msra.mxu0 0
          %2264 = vmatprep.subr.bf16.mxu0 0
          %2265 = vmatpush1.bf16.msra.mxu0 0
          %2266 = vmatprep.subr.bf16.mxu0 0
          %2267 = vmatpush1.bf16.msra.mxu0 0
          %2268 = vmatprep.subr.bf16.mxu0 0
          %2269 = vmatpush1.bf16.msra.mxu0 0
          %2270 = vmatprep.subr.bf16.mxu0 0
          %2271 = vmatpush1.bf16.msra.mxu0 0
          %2272 = vmatprep.subr.bf16.mxu0 0
          %2273 = vmatpush1.bf16.msra.mxu0 0
          %2274 = vmatprep.mubr.bf16.mxu0 0
          %2275 = vmatmul.mubr.bf16.gmra.mrb[0].mxu0 %v2240
          %v2276 = vpop.f32.mrb[0].mxu0
          %v2277 = vadd.f32 %v2212, %v2276
          %v2278 = vpop.f32.mrb[0].mxu0
          %v2279 = vpop.f32.mrb[0].mxu0
          %v2280 = vpop.f32.mrb[0].mxu0
          %2281 = vdwg.mxu0
          %v2282 = vmax.f32 %v2277, 0.0
          %v2283 = vpack.c.bf16 %v2282, %v2282
          %v2284 = vld [vmem:[%s24] sm:$0xf]
          %v2285 = vld [vmem:[%s24 + $0x4] sm:$0xf]
          %v2286 = vld [vmem:[%s24 + $0x8] sm:$0xf]
          %v2287 = vld [vmem:[%s24 + $0xc] sm:$0xf]
          %v2288 = vld [vmem:[%s24 + $0x10] sm:$0xf]
          %v2289 = vld [vmem:[%s24 + $0x14] sm:$0xf]
          %v2290 = vld [vmem:[%s24 + $0x18] sm:$0xf]
          %v2291 = vld [vmem:[%s24 + $0x1c] sm:$0xf]
          %v2292 = vld [vmem:[#allocation4] sm:$0x1]
          %v2294 = vlaneseq
          %v2295 = vshrl.u32 %v2294, 7
          %v2296 = vsub.s32 0, %v2295
          %v2297 = vrot.slane %v2292, %v2296
          %v2307 = vunpack.c.l.b16 %v2284
          %v2308 = vunpack.c.l.b16 %v2285
          %v2309 = vunpack.c.l.b16 %v2286
          %v2310 = vunpack.c.l.b16 %v2287
          %v2311 = vunpack.c.l.b16 %v2288
          %v2312 = vunpack.c.l.b16 %v2289
          %v2313 = vunpack.c.l.b16 %v2290
          %v2314 = vunpack.c.l.b16 %v2291
          %v2315 = vpack.c.b16 %v2308, %v2307
          %v2316 = vpack.c.b16 %v2310, %v2309
          %v2317 = vpack.c.b16 %v2312, %v2311
          %v2318 = vpack.c.b16 %v2314, %v2313
          %v2324 = vsel %vm2238, %v2283, 0
          %2326 = vmatprep.subr.bf16.mxu0 0
          %2327 = vmatpush1.bf16.msra.mxu0 %v2315
          %2328 = vmatprep.subr.bf16.mxu0 0
          %2329 = vmatpush1.bf16.msra.mxu0 %v2316
          %2330 = vmatprep.subr.bf16.mxu0 0
          %2331 = vmatpush1.bf16.msra.mxu0 %v2317
          %2332 = vmatprep.subr.bf16.mxu0 0
          %2333 = vmatpush1.bf16.msra.mxu0 %v2318
          %2334 = vmatprep.subr.bf16.mxu0 0
          %2335 = vmatpush1.bf16.msra.mxu0 0
          %2336 = vmatprep.subr.bf16.mxu0 0
          %2337 = vmatpush1.bf16.msra.mxu0 0
          %2338 = vmatprep.subr.bf16.mxu0 0
          %2339 = vmatpush1.bf16.msra.mxu0 0
          %2340 = vmatprep.subr.bf16.mxu0 0
          %2341 = vmatpush1.bf16.msra.mxu0 0
          %2342 = vmatprep.subr.bf16.mxu0 0
          %2343 = vmatpush1.bf16.msra.mxu0 0
          %2344 = vmatprep.subr.bf16.mxu0 0
          %2345 = vmatpush1.bf16.msra.mxu0 0
          %2346 = vmatprep.subr.bf16.mxu0 0
          %2347 = vmatpush1.bf16.msra.mxu0 0
          %2348 = vmatprep.subr.bf16.mxu0 0
          %2349 = vmatpush1.bf16.msra.mxu0 0
          %2350 = vmatprep.subr.bf16.mxu0 0
          %2351 = vmatpush1.bf16.msra.mxu0 0
          %2352 = vmatprep.subr.bf16.mxu0 0
          %2353 = vmatpush1.bf16.msra.mxu0 0
          %2354 = vmatprep.subr.bf16.mxu0 0
          %2355 = vmatpush1.bf16.msra.mxu0 0
          %2356 = vmatprep.subr.bf16.mxu0 0
          %2357 = vmatpush1.bf16.msra.mxu0 0
          %2358 = vmatprep.mubr.bf16.mxu0 0
          %2359 = vmatmul.mubr.bf16.gmra.mrb[0].mxu0 %v2324
          %v2360 = vpop.f32.mrb[0].mxu0
          %v2361 = vadd.f32 %v2297, %v2360
          %v2362 = vpop.f32.mrb[0].mxu0
          %v2363 = vpop.f32.mrb[0].mxu0
          %v2364 = vpop.f32.mrb[0].mxu0
          %2365 = vdwg.mxu0
          %vm2366 = vcmask 1024
          %2367 = vst.msk [vmem:[%s26] sm:$0x3] %vm2366, %v2361
        $region196: #{tpu_custom_call.1} parent=123 // pred_fallthru
          _
        // Predicated region
        $region197: #{tpu_custom_call.1} parent=123 // pred_check
          %p2368 = pneg %p659
        $region198: #{tpu_custom_call.1} parent=123 // pred_check_branch
          %2370 = sbr.rel (%p2368) target = $region200
        $region199: #{tpu_custom_call.1} parent=123 // pred_region
          _
        $region200: #{tpu_custom_call.1} parent=123 // pred_fallthru
          _
        // Predicated region
        $region201: #{tpu_custom_call.1} parent=123 // pred_check
          %p2371 = pneg %p659
        $region202: #{tpu_custom_call.1} parent=123 // pred_check_branch
          %2373 = sbr.rel (%p2371) target = $region204
        $region203: #{tpu_custom_call.1} parent=123 // pred_region
          _
        $region204: #{tpu_custom_call.1} parent=123 // pred_fallthru
          _
      $region124: #{tpu_custom_call.1} parent=5 // pred_fallthru
        _
      %p2374 = scmp.le.s32.totalorder 2, %s50
      // Predicated region
      $region205: #{tpu_custom_call.1} parent=5 // pred_check
        %p2375 = pneg %p2374
      $region206: #{tpu_custom_call.1} parent=5 // pred_check_branch
        %2377 = sbr.rel (%p2375) target = $region208
      $region207: #{tpu_custom_call.1} parent=5 // pred_region
        %s2378 = ssub.s32 %s50, 2
      $region208: #{tpu_custom_call.1} parent=5 // pred_fallthru
        _
    $region6: #{tpu_custom_call.1} parent=1 // loop_footer
      %s54 = sadd.s32 1, %s50
    $region7: #{tpu_custom_call.1} parent=1 // loop_footer_branch
      %49 = sbr.rel target = $region3
    $region8: #{tpu_custom_call.1} parent=1 // loop_exit
      _
    %2379 = vsyncpa [#allocation6], 1
    %s2380 = scalar_lea.sflag [#allocation6], 1
    %2381 = vsyncpa %s2380, 1
    %2382 = vsyncpa [#allocation8], 1
    %2383 = vsyncpa [#allocation11], 1
    %2384 = vsyncpa [#allocation14], 1
    %2385 = vsyncpa [#allocation17], 1
    %s2386 = scalar_lea.sflag [#allocation17], 1
    %2387 = vsyncpa %s2386, 1
    %2388 = vsyncpa [#allocation20], 1
    %s2389 = scalar_lea.sflag [#allocation20], 1
    %2390 = vsyncpa %s2389, 1
    %2391 = vsyncpa [#allocation23], 1
    %s2392 = scalar_lea.sflag [#allocation23], 1
    %2393 = vsyncpa %s2392, 1
    %2394 = vsyncpa [#allocation26], 1
    %s2395 = scalar_lea.sflag [#allocation26], 1
    %2396 = vsyncpa %s2395, 1

</llo_original>
